<compile_context>
chip_gen: v6e
topology: v6e:2x2x1
jax: 0.10.0
libtpu: 0.0.40
codegen_flags: <defaults>
</compile_context>

<pallas_src>
import functools

import jax
import jax.numpy as jnp
import numpy as np
from jax import lax
from jax.experimental import pallas as pl
from jax.experimental.pallas import tpu as pltpu


def _get_loss_kernel(cc_ref, tgt_ref, coords_ref, types_ref, out_ref, *, K, TB):
    # cc_ref     : (TB, C, 3)    center coordinates
    # tgt_ref    : (TB, 4, M)    target atoms, rows = [x, y, z, type_id]
    # coords_ref : (TB, 3, C, P) generated atom coordinates (component-major, P on lanes)
    # types_ref  : (TB, T, C, P) log-probabilities (class-leading, P on lanes)
    # out_ref    : (1, 128)      6 partial sums in lanes 0..5 (summed over the TB batches)
    C = cc_ref.shape[1]
    M = tgt_ref.shape[2]
    T = types_ref.shape[1]
    P = types_ref.shape[3]
    f32 = jnp.float32

    iota_m = lax.broadcasted_iota(jnp.int32, (C, M), 1)
    iota_p = lax.broadcasted_iota(jnp.int32, (C, P), 1)

    def batch_body(b, carry):
        (s_gen_min, s_tgt_min, s_nll_gen, s_cor_gen, s_nll_tgt, s_cor_tgt) = carry

        cc = cc_ref[b]                      # (C, 3)
        tgt = tgt_ref[b]                    # (4, M)
        cx = coords_ref[b, 0]               # (C, P)
        cy = coords_ref[b, 1]
        cz = coords_ref[b, 2]

        # ---- square_distance(center_coords, target_xyz): matmul expansion (MXU) ----
        txyz = tgt[0:3, :]                                        # (3, M)
        ccn = jnp.sum(cc * cc, axis=1, keepdims=True)             # (C, 1)
        tn = jnp.sum(txyz * txyz, axis=0, keepdims=True)          # (1, M)
        cross = jnp.dot(cc, txyz, preferred_element_type=f32)     # (C, M) MXU
        dist = ccn + tn - 2.0 * cross                             # (C, M)

        # ---- argmax over classes for every generated atom (reused by both accuracies) ----
        best_val = types_ref[b, 0]                                # (C, P) free class slab view
        best_idx = jnp.zeros((C, P), jnp.int32)
        for t in range(1, T):
            lp_t = types_ref[b, t]
            upd = lp_t > best_val                                 # strict -> first occurrence
            best_idx = jnp.where(upd, t, best_idx)
            best_val = jnp.where(upd, lp_t, best_val)
        argmax_gen = best_idx                                     # (C, P)

        # ---- fused K-nearest selection + per-k local-distance / type pass ----
        dwork = dist
        min_k = jnp.full((C, P), jnp.inf, f32)                    # running min over K (gen side)
        tt_gen = jnp.zeros((C, P), f32)                           # type of argmin-K target
        nll_tgt_acc = jnp.zeros((C, P), f32)                      # deferred target-side nll
        cor_tgt_acc = jnp.zeros((C, P), f32)                      # deferred target-side correct
        tgt_min_acc = jnp.zeros((C, 1), f32)                      # deferred min-over-P sums
        for k in range(K):
            # k-th nearest target atom per center: one-hot row gather on the MXU
            mv = jnp.min(dwork, axis=1, keepdims=True)                          # (C, 1)
            idx = jnp.min(jnp.where(dwork == mv, iota_m, M), axis=1,
                          keepdims=True)                                        # (C, 1)
            oh_m = iota_m == idx                                                # (C, M)
            rowk = lax.dot_general(oh_m.astype(f32), tgt, (((1,), (1,)), ((), ())),
                                   preferred_element_type=f32)                  # (C, 4)
            dwork = jnp.where(oh_m, jnp.inf, dwork)

            tx = rowk[:, 0:1]
            ty = rowk[:, 1:2]
            tz = rowk[:, 2:3]
            typ_f = rowk[:, 3:4]                                  # (C, 1) float type id (exact)
            typ_i = typ_f.astype(jnp.int32)

            dx = cx - tx
            dy = cy - ty
            dz = cz - tz
            dl_k = dx * dx + dy * dy + dz * dz                    # (C, P)

            # gen side: running argmin over K (strict '<' keeps first occurrence)
            upd = dl_k < min_k
            tt_gen = jnp.where(upd, typ_f, tt_gen)
            min_k = jnp.where(upd, dl_k, min_k)

            # target side: min / argmin over P (XLU); all sums deferred to after the loop
            mv_p = jnp.min(dl_k, axis=1, keepdims=True)           # (C, 1)
            tgt_min_acc = tgt_min_acc + mv_p
            idx_p = jnp.min(jnp.where(dl_k == mv_p, iota_p, P),
                            axis=1, keepdims=True)                # (C, 1)
            oh_k = iota_p == idx_p                                # (C, P) one-hot over P

            # log p[target class]; class slabs are free views in the (T, C, P) layout
            lp_sel = jnp.zeros((C, P), f32)
            for t in range(T):
                lp_sel = jnp.where(typ_i == t, types_ref[b, t], lp_sel)
            nll_tgt_acc = nll_tgt_acc + jnp.where(oh_k, lp_sel, 0.0)
            cor_tgt_acc = cor_tgt_acc + jnp.where(
                oh_k & (argmax_gen == typ_i), 1.0, 0.0)

        # ---- gen side totals + deferred reductions ----
        tt_gen_i = tt_gen.astype(jnp.int32)
        lp_at_tt = jnp.zeros((C, P), f32)
        for t in range(T):
            lp_at_tt = jnp.where(tt_gen_i == t, types_ref[b, t], lp_at_tt)

        s_gen_min = s_gen_min + jnp.sum(min_k)
        s_tgt_min = s_tgt_min + jnp.sum(tgt_min_acc)
        s_nll_gen = s_nll_gen - jnp.sum(lp_at_tt)
        s_cor_gen = s_cor_gen + jnp.sum((argmax_gen == tt_gen_i).astype(f32))
        s_nll_tgt = s_nll_tgt - jnp.sum(nll_tgt_acc)
        s_cor_tgt = s_cor_tgt + jnp.sum(cor_tgt_acc)
        return (s_gen_min, s_tgt_min, s_nll_gen, s_cor_gen, s_nll_tgt, s_cor_tgt)

    init = tuple(jnp.zeros((), f32) for _ in range(6))
    if TB <= 2:
        carry = init
        for b in range(TB):
            carry = batch_body(b, carry)
    else:
        carry = lax.fori_loop(0, TB, batch_body, init)

    # ---- write the 6 partial sums into lanes 0..5 of the lane-dense (1, 128) output ----
    lane = lax.broadcasted_iota(jnp.int32, (1, 128), 1)
    out = jnp.zeros((1, 128), jnp.float32)
    for i, v in enumerate(carry):
        out = jnp.where(lane == i, v, out)
    out_ref[...] = out


def _pad(x, m):
    return ((x + m - 1) // m) * m


def _vmem_capacity_bytes():
    try:
        return int(pltpu.get_tpu_info().vmem_capacity_bytes)
    except Exception:
        return 64 * 1024 * 1024          # conservative fallback (v7x per-TC VMEM)


def get_loss_pallas(center_coords, coords, types, target,
                    atom_num_per_last_point=10, batch_block=None):
    B, C, _ = center_coords.shape
    P = coords.shape[2]
    T = types.shape[-1]
    M = target.shape[1]
    K = int(atom_num_per_last_point)
    assert K <= M, "atom_num_per_last_point must be <= number of target atoms"

    # Lane-dense layouts (M / P on the 128-lane axis), classes leading for free slab views.
    # TODO(synk): have the upstream producer emit these layouts directly so the transposes
    #             fuse away instead of costing an extra HBM round trip on the big tensors.
    tgt_t = jnp.transpose(target, (0, 2, 1)).astype(jnp.float32)        # (B, 4, M)
    coords_t = jnp.transpose(coords, (0, 3, 1, 2)).astype(jnp.float32)  # (B, 3, C, P)
    types_t = jnp.transpose(types, (0, 3, 1, 2)).astype(jnp.float32)    # (B, T, C, P)
    cc = center_coords.astype(jnp.float32)                              # (B, C, 3)

    # Padded VMEM footprint per batch element (f32, (sublane=8, lane=128) tiling).
    per_batch = 4 * (
        _pad(C, 8) * 128                          # center coords (C, 3) -> (C, 128)
        + _pad(4, 8) * _pad(M, 128)               # target (4, M)
        + 3 * _pad(C, 8) * _pad(P, 128)           # coords (3, C, P)
        + T * _pad(C, 8) * _pad(P, 128))          # types  (T, C, P)

    vmem_cap = _vmem_capacity_bytes()
    if batch_block is None:
        # Budget ~3/16 of physical VMEM for the double-buffered input block
        # (~24 MiB on 128 MiB v5e/v6e, ~12 MiB on 64 MiB v7x).
        budget = (3 * vmem_cap) // 16
        tb_cap = B // 2 if B >= 2 else 1          # keep >= 2 grid blocks (dual-TC on v7x)
        cands = [c for c in range(1, tb_cap + 1)
                 if B % c == 0 and 2 * c * per_batch <= budget]
        if cands:
            even = [c for c in cands if (B // c) % 2 == 0]
            TB = max(even) if even else max(cands)
        else:
            TB = 1
    else:
        TB = int(batch_block)
        assert B % TB == 0
    n_blocks = B // TB

    vmem_limit = int(min(int(0.6 * vmem_cap),
                         max(16 << 20, 3 * TB * per_batch + (4 << 20))))

    flops = B * (2 * C * M * 3            # center-target distance
                 + K * (2 * C * M * 4)    # K-selection + one-hot gather matmul
                 + C * P * K * 12         # local distances + mins + masked accumulation
                 + C * P * T * 6)         # type gathers / argmax
    bytes_accessed = 4 * int(cc.size + tgt_t.size + coords_t.size + types_t.size) \
        + 4 * n_blocks * 128
    cost = pl.CostEstimate(flops=int(flops), transcendentals=0,
                           bytes_accessed=int(bytes_accessed))

    kernel = functools.partial(_get_loss_kernel, K=K, TB=TB)
    out = pl.pallas_call(
        kernel,
        out_shape=jax.ShapeDtypeStruct((n_blocks, 1, 128), jnp.float32),
        grid_spec=pltpu.PrefetchScalarGridSpec(
            num_scalar_prefetch=0,
            grid=(n_blocks,),
            in_specs=[
                pl.BlockSpec((TB, C, 3), lambda i: (i, 0, 0)),
                pl.BlockSpec((TB, 4, M), lambda i: (i, 0, 0)),
                pl.BlockSpec((TB, 3, C, P), lambda i: (i, 0, 0, 0)),
                pl.BlockSpec((TB, T, C, P), lambda i: (i, 0, 0, 0)),
            ],
            out_specs=pl.BlockSpec((None, 1, 128), lambda i: (i, 0, 0)),
        ),
        compiler_params=pltpu.CompilerParams(
            dimension_semantics=("parallel",),
            vmem_limit_bytes=vmem_limit),
        cost_estimate=cost,
    )(cc, tgt_t, coords_t, types_t)

    sums = jnp.sum(out[:, 0, :6], axis=0)          # (6,)
    n_gen = B * C * P
    n_tgt = B * C * K
    emd_loss = sums[0] / n_gen + sums[1] / n_tgt
    gen_type_loss = sums[2] / n_gen
    gen_type_correct = sums[3] / n_gen
    target_type_loss = sums[4] / n_tgt
    target_type_correct = sums[5] / n_tgt
    loss = gen_type_loss + target_type_loss + emd_loss
    return (loss, gen_type_loss, target_type_loss, emd_loss,
            gen_type_correct, target_type_correct)


# ----------------------- pure-JAX reference (for verification) -----------------------
def _sqdist(a, b):
    d = a[..., :, None, :] - b[..., None, :, :]
    return jnp.sum(d * d, axis=-1)


def get_loss_reference(center_coords, coords, types, target, K):
    B, C, _ = center_coords.shape
    M = target.shape[1]
    T = types.shape[-1]
    dist = _sqdist(center_coords, target[:, :, :3])                    # (B,C,M)
    inds = jnp.argsort(dist, axis=-1)[:, :, :K]                        # (B,C,K)
    tex = jnp.take_along_axis(
        jnp.broadcast_to(target[:, None], (B, C, M, 4)),
        jnp.broadcast_to(inds[..., None], (B, C, K, 4)), axis=2)       # (B,C,K,4)
    dl = _sqdist(coords, tex[..., :3])                                 # (B,C,P,K)
    idx_gen = jnp.argmin(dl, axis=-1)                                  # (B,C,P)
    idx_tgt = jnp.argmin(dl, axis=-2)                                  # (B,C,K)
    emd_loss = jnp.mean(jnp.min(dl, -1)) + jnp.mean(jnp.min(dl, -2))
    tex_type = tex[..., 3].astype(jnp.int32)                           # (B,C,K)
    tt_gen = jnp.take_along_axis(tex_type, idx_gen, axis=-1)           # (B,C,P)
    gen_type_loss = -jnp.mean(jnp.take_along_axis(types, tt_gen[..., None], axis=-1))
    gen_type_correct = jnp.mean((jnp.argmax(types, -1) == tt_gen).astype(jnp.float32))
    gtt = jnp.take_along_axis(
        types, jnp.broadcast_to(idx_tgt[..., None], (B, C, K, T)), axis=-2)
    target_type_loss = -jnp.mean(jnp.take_along_axis(gtt, tex_type[..., None], axis=-1))
    target_type_correct = jnp.mean((jnp.argmax(gtt, -1) == tex_type).astype(jnp.float32))
    loss = gen_type_loss + target_type_loss + emd_loss
    return (loss, gen_type_loss, target_type_loss, emd_loss,
            gen_type_correct, target_type_correct)


def _run_case(key, B, C, M, P, T, K, batch_block=None):
    k1, k2, k3, k4, k5 = jax.random.split(key, 5)
    center_coords = jax.random.normal(k1, (B, C, 3), jnp.float32)
    coords = center_coords[:, :, None, :] + 0.1 * jax.random.normal(
        k2, (B, C, P, 3), jnp.float32)
    types = jax.nn.log_softmax(
        jax.random.normal(k3, (B, C, P, T), jnp.float32), axis=-1)
    target_xyz = jax.random.normal(k4, (B, M, 3), jnp.float32)
    target_type = jax.random.randint(k5, (B, M, 1), 0, T).astype(jnp.float32)
    target = jnp.concatenate([target_xyz, target_type], axis=-1)

    outs = jax.block_until_ready(
        get_loss_pallas(center_coords, coords, types, target,
                        atom_num_per_last_point=K, batch_block=batch_block))
    refs = get_loss_reference(center_coords, coords, types, target, K)
    for o, r in zip(outs, refs):
        np.testing.assert_allclose(np.asarray(o), np.asarray(r),
                                   rtol=1e-4, atol=1e-4)


if __name__ == "__main__":
    key = jax.random.PRNGKey(0)
    k_a, k_b = jax.random.split(key)

    # Case 1: small batch (TB=1, unrolled path, 2 grid blocks).
    _run_case(k_a, B=2, C=8, M=16, P=8, T=4, K=4)

    # Case 2: larger batch so the auto-selector picks TB>2 and exercises the fori_loop path.
    _run_case(k_b, B=8, C=8, M=16, P=8, T=5, K=3)

    print("KERNEL_OK")
</pallas_src>

<mosaic_0001>
module attributes {stable_mosaic.version = 11 : i64} {
  func.func @_get_loss_kernel(%arg0: i32, %arg1: memref<1x8x3xf32, #tpu.memory_space<vmem>>, %arg2: memref<1x4x16xf32, #tpu.memory_space<vmem>>, %arg3: memref<1x3x8x8xf32, #tpu.memory_space<vmem>>, %arg4: memref<1x4x8x8xf32, #tpu.memory_space<vmem>>, %arg5: memref<1x1x128xf32, #tpu.memory_space<vmem>>) attributes {dimension_semantics = [#tpu.dimension_semantics<parallel>], iteration_bounds = array<i64: 2>, scalar_prefetch = 0 : i64, scratch_operands = 0 : i64, tpu.core_type = #tpu.core_type<tc>, window_params = [{transform_indices = @transform_0, window_bounds = array<i64: 1, 8, 3>}, {transform_indices = @transform_1, window_bounds = array<i64: 1, 4, 16>}, {transform_indices = @transform_2, window_bounds = array<i64: 1, 3, 8, 8>}, {transform_indices = @transform_3, window_bounds = array<i64: 1, 4, 8, 8>}, {transform_indices = @transform_4, window_bounds = array<i64: 1, 1, 128>}]} {
    %0 = tpu.iota {dimensions = array<i32: 1>} : vector<8x16xi32>
    %1 = tpu.iota {dimensions = array<i32: 1>} : vector<8x8xi32>
    %c0 = arith.constant 0 : index
    %c0_0 = arith.constant 0 : index
    %c0_1 = arith.constant 0 : index
    %2 = vector.load %arg1[%c0, %c0_0, %c0_1] : memref<1x8x3xf32, #tpu.memory_space<vmem>>, vector<1x8x3xf32>
    %3 = vector.shape_cast %2 : vector<1x8x3xf32> to vector<8x3xf32>
    %c0_2 = arith.constant 0 : index
    %c0_3 = arith.constant 0 : index
    %c0_4 = arith.constant 0 : index
    %4 = vector.load %arg2[%c0_2, %c0_3, %c0_4] : memref<1x4x16xf32, #tpu.memory_space<vmem>>, vector<1x4x16xf32>
    %5 = vector.shape_cast %4 : vector<1x4x16xf32> to vector<4x16xf32>
    %c0_5 = arith.constant 0 : index
    %c0_6 = arith.constant 0 : index
    %c0_7 = arith.constant 0 : index
    %c0_8 = arith.constant 0 : index
    %6 = vector.load %arg3[%c0_5, %c0_6, %c0_7, %c0_8] : memref<1x3x8x8xf32, #tpu.memory_space<vmem>>, vector<1x1x8x8xf32>
    %7 = vector.shape_cast %6 : vector<1x1x8x8xf32> to vector<8x8xf32>
    %c0_9 = arith.constant 0 : index
    %c1 = arith.constant 1 : index
    %c0_10 = arith.constant 0 : index
    %c0_11 = arith.constant 0 : index
    %8 = vector.load %arg3[%c0_9, %c1, %c0_10, %c0_11] : memref<1x3x8x8xf32, #tpu.memory_space<vmem>>, vector<1x1x8x8xf32>
    %9 = vector.shape_cast %8 : vector<1x1x8x8xf32> to vector<8x8xf32>
    %c0_12 = arith.constant 0 : index
    %c2 = arith.constant 2 : index
    %c0_13 = arith.constant 0 : index
    %c0_14 = arith.constant 0 : index
    %10 = vector.load %arg3[%c0_12, %c2, %c0_13, %c0_14] : memref<1x3x8x8xf32, #tpu.memory_space<vmem>>, vector<1x1x8x8xf32>
    %11 = vector.shape_cast %10 : vector<1x1x8x8xf32> to vector<8x8xf32>
    %12 = vector.extract_strided_slice %5 {offsets = [0, 0], sizes = [3, 16], strides = [1, 1]} : vector<4x16xf32> to vector<3x16xf32>
    %13 = arith.mulf %3, %3 : vector<8x3xf32>
    %cst = arith.constant dense<0.000000e+00> : vector<8xf32>
    %14 = vector.multi_reduction <add>, %13, %cst [1] : vector<8x3xf32> to vector<8xf32>
    %15 = vector.shape_cast %14 : vector<8xf32> to vector<8x1xf32>
    %16 = arith.mulf %12, %12 : vector<3x16xf32>
    %cst_15 = arith.constant dense<0.000000e+00> : vector<16xf32>
    %17 = vector.multi_reduction <add>, %16, %cst_15 [0] : vector<3x16xf32> to vector<16xf32>
    %18 = vector.shape_cast %17 : vector<16xf32> to vector<1x16xf32>
    %cst_16 = arith.constant dense<0.000000e+00> : vector<8x16xf32>
    %19 = tpu.matmul %3, %12, %cst_16 {dimension_numbers = #tpu.dot_dimension_numbers<[1], [0], [0], [1], [0, 0, 1, 1], [], []>} : vector<8x3xf32>, vector<3x16xf32>, vector<8x16xf32> -> vector<8x16xf32>
    %20 = vector.broadcast %15 : vector<8x1xf32> to vector<8x16xf32>
    %21 = vector.broadcast %18 : vector<1x16xf32> to vector<8x16xf32>
    %22 = arith.addf %20, %21 : vector<8x16xf32>
    %cst_17 = arith.constant 2.000000e+00 : f32
    %23 = vector.broadcast %cst_17 : f32 to vector<8x16xf32>
    %24 = arith.mulf %23, %19 : vector<8x16xf32>
    %25 = arith.subf %22, %24 : vector<8x16xf32>
    %c0_18 = arith.constant 0 : index
    %c0_19 = arith.constant 0 : index
    %c0_20 = arith.constant 0 : index
    %c0_21 = arith.constant 0 : index
    %26 = vector.load %arg4[%c0_18, %c0_19, %c0_20, %c0_21] : memref<1x4x8x8xf32, #tpu.memory_space<vmem>>, vector<1x1x8x8xf32>
    %27 = vector.shape_cast %26 : vector<1x1x8x8xf32> to vector<8x8xf32>
    %c0_i32 = arith.constant 0 : i32
    %28 = vector.broadcast %c0_i32 : i32 to vector<8x8xi32>
    %c0_22 = arith.constant 0 : index
    %c1_23 = arith.constant 1 : index
    %c0_24 = arith.constant 0 : index
    %c0_25 = arith.constant 0 : index
    %29 = vector.load %arg4[%c0_22, %c1_23, %c0_24, %c0_25] : memref<1x4x8x8xf32, #tpu.memory_space<vmem>>, vector<1x1x8x8xf32>
    %30 = vector.shape_cast %29 : vector<1x1x8x8xf32> to vector<8x8xf32>
    %31 = arith.cmpf ogt, %30, %27 : vector<8x8xf32>
    %c1_i32 = arith.constant 1 : i32
    %32 = vector.broadcast %c1_i32 : i32 to vector<8x8xi32>
    %33 = arith.select %31, %32, %28 : vector<8x8xi1>, vector<8x8xi32>
    %34 = arith.select %31, %30, %27 : vector<8x8xi1>, vector<8x8xf32>
    %c0_26 = arith.constant 0 : index
    %c2_27 = arith.constant 2 : index
    %c0_28 = arith.constant 0 : index
    %c0_29 = arith.constant 0 : index
    %35 = vector.load %arg4[%c0_26, %c2_27, %c0_28, %c0_29] : memref<1x4x8x8xf32, #tpu.memory_space<vmem>>, vector<1x1x8x8xf32>
    %36 = vector.shape_cast %35 : vector<1x1x8x8xf32> to vector<8x8xf32>
    %37 = arith.cmpf ogt, %36, %34 : vector<8x8xf32>
    %c2_i32 = arith.constant 2 : i32
    %38 = vector.broadcast %c2_i32 : i32 to vector<8x8xi32>
    %39 = arith.select %37, %38, %33 : vector<8x8xi1>, vector<8x8xi32>
    %40 = arith.select %37, %36, %34 : vector<8x8xi1>, vector<8x8xf32>
    %c0_30 = arith.constant 0 : index
    %c3 = arith.constant 3 : index
    %c0_31 = arith.constant 0 : index
    %c0_32 = arith.constant 0 : index
    %41 = vector.load %arg4[%c0_30, %c3, %c0_31, %c0_32] : memref<1x4x8x8xf32, #tpu.memory_space<vmem>>, vector<1x1x8x8xf32>
    %42 = vector.shape_cast %41 : vector<1x1x8x8xf32> to vector<8x8xf32>
    %43 = arith.cmpf ogt, %42, %40 : vector<8x8xf32>
    %c3_i32 = arith.constant 3 : i32
    %44 = vector.broadcast %c3_i32 : i32 to vector<8x8xi32>
    %45 = arith.select %43, %44, %39 : vector<8x8xi1>, vector<8x8xi32>
    %cst_33 = arith.constant 0x7F800000 : f32
    %46 = vector.broadcast %cst_33 : f32 to vector<8x8xf32>
    %cst_34 = arith.constant 0.000000e+00 : f32
    %47 = vector.broadcast %cst_34 : f32 to vector<8x8xf32>
    %cst_35 = arith.constant 0.000000e+00 : f32
    %48 = vector.broadcast %cst_35 : f32 to vector<8x8xf32>
    %cst_36 = arith.constant 0.000000e+00 : f32
    %49 = vector.broadcast %cst_36 : f32 to vector<8x8xf32>
    %cst_37 = arith.constant 0.000000e+00 : f32
    %50 = vector.broadcast %cst_37 : f32 to vector<8x1xf32>
    %cst_38 = arith.constant dense<0x7F800000> : vector<8xf32>
    %51 = vector.multi_reduction <minimumf>, %25, %cst_38 [1] : vector<8x16xf32> to vector<8xf32>
    %52 = vector.shape_cast %51 : vector<8xf32> to vector<8x1xf32>
    %53 = vector.broadcast %52 : vector<8x1xf32> to vector<8x16xf32>
    %54 = arith.cmpf oeq, %25, %53 : vector<8x16xf32>
    %c16_i32 = arith.constant 16 : i32
    %55 = vector.broadcast %c16_i32 : i32 to vector<8x16xi32>
    %56 = arith.select %54, %0, %55 : vector<8x16xi1>, vector<8x16xi32>
    %cst_39 = arith.constant dense<2147483647> : vector<8xi32>
    %57 = vector.multi_reduction <minsi>, %56, %cst_39 [1] : vector<8x16xi32> to vector<8xi32>
    %58 = vector.shape_cast %57 : vector<8xi32> to vector<8x1xi32>
    %59 = vector.broadcast %58 : vector<8x1xi32> to vector<8x16xi32>
    %60 = arith.cmpi eq, %0, %59 : vector<8x16xi32>
    %61 = arith.extui %60 : vector<8x16xi1> to vector<8x16xi32>
    %62 = arith.sitofp %61 : vector<8x16xi32> to vector<8x16xf32>
    %cst_40 = arith.constant dense<0.000000e+00> : vector<8x4xf32>
    %63 = tpu.matmul %62, %5, %cst_40 {dimension_numbers = #tpu.dot_dimension_numbers<[1], [1], [0], [0], [0, 0, 1, 0], [], []>} : vector<8x16xf32>, vector<4x16xf32>, vector<8x4xf32> -> vector<8x4xf32>
    %cst_41 = arith.constant 0x7F800000 : f32
    %64 = vector.broadcast %cst_41 : f32 to vector<8x16xf32>
    %65 = arith.select %60, %64, %25 : vector<8x16xi1>, vector<8x16xf32>
    %66 = vector.extract_strided_slice %63 {offsets = [0, 0], sizes = [8, 1], strides = [1, 1]} : vector<8x4xf32> to vector<8x1xf32>
    %67 = vector.extract_strided_slice %63 {offsets = [0, 1], sizes = [8, 1], strides = [1, 1]} : vector<8x4xf32> to vector<8x1xf32>
    %68 = vector.extract_strided_slice %63 {offsets = [0, 2], sizes = [8, 1], strides = [1, 1]} : vector<8x4xf32> to vector<8x1xf32>
    %69 = vector.extract_strided_slice %63 {offsets = [0, 3], sizes = [8, 1], strides = [1, 1]} : vector<8x4xf32> to vector<8x1xf32>
    %70 = arith.fptosi %69 : vector<8x1xf32> to vector<8x1xi32>
    %71 = vector.broadcast %66 : vector<8x1xf32> to vector<8x8xf32>
    %72 = arith.subf %7, %71 : vector<8x8xf32>
    %73 = vector.broadcast %67 : vector<8x1xf32> to vector<8x8xf32>
    %74 = arith.subf %9, %73 : vector<8x8xf32>
    %75 = vector.broadcast %68 : vector<8x1xf32> to vector<8x8xf32>
    %76 = arith.subf %11, %75 : vector<8x8xf32>
    %77 = arith.mulf %72, %72 : vector<8x8xf32>
    %78 = arith.mulf %74, %74 : vector<8x8xf32>
    %79 = arith.addf %77, %78 : vector<8x8xf32>
    %80 = arith.mulf %76, %76 : vector<8x8xf32>
    %81 = arith.addf %79, %80 : vector<8x8xf32>
    %82 = arith.cmpf olt, %81, %46 : vector<8x8xf32>
    %83 = vector.shape_cast %69 : vector<8x1xf32> to vector<8x1xf32>
    %84 = vector.broadcast %83 : vector<8x1xf32> to vector<8x8xf32>
    %85 = arith.select %82, %84, %47 : vector<8x8xi1>, vector<8x8xf32>
    %86 = arith.select %82, %81, %46 : vector<8x8xi1>, vector<8x8xf32>
    %cst_42 = arith.constant dense<0x7F800000> : vector<8xf32>
    %87 = vector.multi_reduction <minimumf>, %81, %cst_42 [1] : vector<8x8xf32> to vector<8xf32>
    %88 = vector.shape_cast %87 : vector<8xf32> to vector<8x1xf32>
    %89 = arith.addf %50, %88 : vector<8x1xf32>
    %90 = vector.broadcast %88 : vector<8x1xf32> to vector<8x8xf32>
    %91 = arith.cmpf oeq, %81, %90 : vector<8x8xf32>
    %c8_i32 = arith.constant 8 : i32
    %92 = vector.broadcast %c8_i32 : i32 to vector<8x8xi32>
    %93 = arith.select %91, %1, %92 : vector<8x8xi1>, vector<8x8xi32>
    %cst_43 = arith.constant dense<2147483647> : vector<8xi32>
    %94 = vector.multi_reduction <minsi>, %93, %cst_43 [1] : vector<8x8xi32> to vector<8xi32>
    %95 = vector.shape_cast %94 : vector<8xi32> to vector<8x1xi32>
    %96 = vector.broadcast %95 : vector<8x1xi32> to vector<8x8xi32>
    %97 = arith.cmpi eq, %1, %96 : vector<8x8xi32>
    %cst_44 = arith.constant 0.000000e+00 : f32
    %98 = vector.broadcast %cst_44 : f32 to vector<8x8xf32>
    %c0_i32_45 = arith.constant 0 : i32
    %99 = vector.broadcast %c0_i32_45 : i32 to vector<8x1xi32>
    %100 = arith.cmpi eq, %70, %99 : vector<8x1xi32>
    %c0_46 = arith.constant 0 : index
    %c0_47 = arith.constant 0 : index
    %c0_48 = arith.constant 0 : index
    %c0_49 = arith.constant 0 : index
    %101 = vector.load %arg4[%c0_46, %c0_47, %c0_48, %c0_49] : memref<1x4x8x8xf32, #tpu.memory_space<vmem>>, vector<1x1x8x8xf32>
    %102 = vector.shape_cast %101 : vector<1x1x8x8xf32> to vector<8x8xf32>
    %103 = vector.shape_cast %100 : vector<8x1xi1> to vector<8x1xi1>
    %104 = vector.broadcast %103 : vector<8x1xi1> to vector<8x8xi1>
    %105 = arith.select %104, %102, %98 : vector<8x8xi1>, vector<8x8xf32>
    %c1_i32_50 = arith.constant 1 : i32
    %106 = vector.broadcast %c1_i32_50 : i32 to vector<8x1xi32>
    %107 = arith.cmpi eq, %70, %106 : vector<8x1xi32>
    %c0_51 = arith.constant 0 : index
    %c1_52 = arith.constant 1 : index
    %c0_53 = arith.constant 0 : index
    %c0_54 = arith.constant 0 : index
    %108 = vector.load %arg4[%c0_51, %c1_52, %c0_53, %c0_54] : memref<1x4x8x8xf32, #tpu.memory_space<vmem>>, vector<1x1x8x8xf32>
    %109 = vector.shape_cast %108 : vector<1x1x8x8xf32> to vector<8x8xf32>
    %110 = vector.shape_cast %107 : vector<8x1xi1> to vector<8x1xi1>
    %111 = vector.broadcast %110 : vector<8x1xi1> to vector<8x8xi1>
    %112 = arith.select %111, %109, %105 : vector<8x8xi1>, vector<8x8xf32>
    %c2_i32_55 = arith.constant 2 : i32
    %113 = vector.broadcast %c2_i32_55 : i32 to vector<8x1xi32>
    %114 = arith.cmpi eq, %70, %113 : vector<8x1xi32>
    %c0_56 = arith.constant 0 : index
    %c2_57 = arith.constant 2 : index
    %c0_58 = arith.constant 0 : index
    %c0_59 = arith.constant 0 : index
    %115 = vector.load %arg4[%c0_56, %c2_57, %c0_58, %c0_59] : memref<1x4x8x8xf32, #tpu.memory_space<vmem>>, vector<1x1x8x8xf32>
    %116 = vector.shape_cast %115 : vector<1x1x8x8xf32> to vector<8x8xf32>
    %117 = vector.shape_cast %114 : vector<8x1xi1> to vector<8x1xi1>
    %118 = vector.broadcast %117 : vector<8x1xi1> to vector<8x8xi1>
    %119 = arith.select %118, %116, %112 : vector<8x8xi1>, vector<8x8xf32>
    %c3_i32_60 = arith.constant 3 : i32
    %120 = vector.broadcast %c3_i32_60 : i32 to vector<8x1xi32>
    %121 = arith.cmpi eq, %70, %120 : vector<8x1xi32>
    %c0_61 = arith.constant 0 : index
    %c3_62 = arith.constant 3 : index
    %c0_63 = arith.constant 0 : index
    %c0_64 = arith.constant 0 : index
    %122 = vector.load %arg4[%c0_61, %c3_62, %c0_63, %c0_64] : memref<1x4x8x8xf32, #tpu.memory_space<vmem>>, vector<1x1x8x8xf32>
    %123 = vector.shape_cast %122 : vector<1x1x8x8xf32> to vector<8x8xf32>
    %124 = vector.shape_cast %121 : vector<8x1xi1> to vector<8x1xi1>
    %125 = vector.broadcast %124 : vector<8x1xi1> to vector<8x8xi1>
    %126 = arith.select %125, %123, %119 : vector<8x8xi1>, vector<8x8xf32>
    %cst_65 = arith.constant 0.000000e+00 : f32
    %127 = vector.broadcast %cst_65 : f32 to vector<8x8xf32>
    %128 = arith.select %97, %126, %127 : vector<8x8xi1>, vector<8x8xf32>
    %129 = arith.addf %48, %128 : vector<8x8xf32>
    %130 = vector.broadcast %70 : vector<8x1xi32> to vector<8x8xi32>
    %131 = arith.cmpi eq, %45, %130 : vector<8x8xi32>
    %132 = arith.andi %97, %131 : vector<8x8xi1>
    %cst_66 = arith.constant 1.000000e+00 : f32
    %cst_67 = arith.constant 0.000000e+00 : f32
    %133 = vector.broadcast %cst_66 : f32 to vector<8x8xf32>
    %134 = vector.broadcast %cst_67 : f32 to vector<8x8xf32>
    %135 = arith.select %132, %133, %134 : vector<8x8xi1>, vector<8x8xf32>
    %136 = arith.addf %49, %135 : vector<8x8xf32>
    %cst_68 = arith.constant dense<0x7F800000> : vector<8xf32>
    %137 = vector.multi_reduction <minimumf>, %65, %cst_68 [1] : vector<8x16xf32> to vector<8xf32>
    %138 = vector.shape_cast %137 : vector<8xf32> to vector<8x1xf32>
    %139 = vector.broadcast %138 : vector<8x1xf32> to vector<8x16xf32>
    %140 = arith.cmpf oeq, %65, %139 : vector<8x16xf32>
    %c16_i32_69 = arith.constant 16 : i32
    %141 = vector.broadcast %c16_i32_69 : i32 to vector<8x16xi32>
    %142 = arith.select %140, %0, %141 : vector<8x16xi1>, vector<8x16xi32>
    %cst_70 = arith.constant dense<2147483647> : vector<8xi32>
    %143 = vector.multi_reduction <minsi>, %142, %cst_70 [1] : vector<8x16xi32> to vector<8xi32>
    %144 = vector.shape_cast %143 : vector<8xi32> to vector<8x1xi32>
    %145 = vector.broadcast %144 : vector<8x1xi32> to vector<8x16xi32>
    %146 = arith.cmpi eq, %0, %145 : vector<8x16xi32>
    %147 = arith.extui %146 : vector<8x16xi1> to vector<8x16xi32>
    %148 = arith.sitofp %147 : vector<8x16xi32> to vector<8x16xf32>
    %cst_71 = arith.constant dense<0.000000e+00> : vector<8x4xf32>
    %149 = tpu.matmul %148, %5, %cst_71 {dimension_numbers = #tpu.dot_dimension_numbers<[1], [1], [0], [0], [0, 0, 1, 0], [], []>} : vector<8x16xf32>, vector<4x16xf32>, vector<8x4xf32> -> vector<8x4xf32>
    %cst_72 = arith.constant 0x7F800000 : f32
    %150 = vector.broadcast %cst_72 : f32 to vector<8x16xf32>
    %151 = arith.select %146, %150, %65 : vector<8x16xi1>, vector<8x16xf32>
    %152 = vector.extract_strided_slice %149 {offsets = [0, 0], sizes = [8, 1], strides = [1, 1]} : vector<8x4xf32> to vector<8x1xf32>
    %153 = vector.extract_strided_slice %149 {offsets = [0, 1], sizes = [8, 1], strides = [1, 1]} : vector<8x4xf32> to vector<8x1xf32>
    %154 = vector.extract_strided_slice %149 {offsets = [0, 2], sizes = [8, 1], strides = [1, 1]} : vector<8x4xf32> to vector<8x1xf32>
    %155 = vector.extract_strided_slice %149 {offsets = [0, 3], sizes = [8, 1], strides = [1, 1]} : vector<8x4xf32> to vector<8x1xf32>
    %156 = arith.fptosi %155 : vector<8x1xf32> to vector<8x1xi32>
    %157 = vector.broadcast %152 : vector<8x1xf32> to vector<8x8xf32>
    %158 = arith.subf %7, %157 : vector<8x8xf32>
    %159 = vector.broadcast %153 : vector<8x1xf32> to vector<8x8xf32>
    %160 = arith.subf %9, %159 : vector<8x8xf32>
    %161 = vector.broadcast %154 : vector<8x1xf32> to vector<8x8xf32>
    %162 = arith.subf %11, %161 : vector<8x8xf32>
    %163 = arith.mulf %158, %158 : vector<8x8xf32>
    %164 = arith.mulf %160, %160 : vector<8x8xf32>
    %165 = arith.addf %163, %164 : vector<8x8xf32>
    %166 = arith.mulf %162, %162 : vector<8x8xf32>
    %167 = arith.addf %165, %166 : vector<8x8xf32>
    %168 = arith.cmpf olt, %167, %86 : vector<8x8xf32>
    %169 = vector.shape_cast %155 : vector<8x1xf32> to vector<8x1xf32>
    %170 = vector.broadcast %169 : vector<8x1xf32> to vector<8x8xf32>
    %171 = arith.select %168, %170, %85 : vector<8x8xi1>, vector<8x8xf32>
    %172 = arith.select %168, %167, %86 : vector<8x8xi1>, vector<8x8xf32>
    %cst_73 = arith.constant dense<0x7F800000> : vector<8xf32>
    %173 = vector.multi_reduction <minimumf>, %167, %cst_73 [1] : vector<8x8xf32> to vector<8xf32>
    %174 = vector.shape_cast %173 : vector<8xf32> to vector<8x1xf32>
    %175 = arith.addf %89, %174 : vector<8x1xf32>
    %176 = vector.broadcast %174 : vector<8x1xf32> to vector<8x8xf32>
    %177 = arith.cmpf oeq, %167, %176 : vector<8x8xf32>
    %c8_i32_74 = arith.constant 8 : i32
    %178 = vector.broadcast %c8_i32_74 : i32 to vector<8x8xi32>
    %179 = arith.select %177, %1, %178 : vector<8x8xi1>, vector<8x8xi32>
    %cst_75 = arith.constant dense<2147483647> : vector<8xi32>
    %180 = vector.multi_reduction <minsi>, %179, %cst_75 [1] : vector<8x8xi32> to vector<8xi32>
    %181 = vector.shape_cast %180 : vector<8xi32> to vector<8x1xi32>
    %182 = vector.broadcast %181 : vector<8x1xi32> to vector<8x8xi32>
    %183 = arith.cmpi eq, %1, %182 : vector<8x8xi32>
    %cst_76 = arith.constant 0.000000e+00 : f32
    %184 = vector.broadcast %cst_76 : f32 to vector<8x8xf32>
    %c0_i32_77 = arith.constant 0 : i32
    %185 = vector.broadcast %c0_i32_77 : i32 to vector<8x1xi32>
    %186 = arith.cmpi eq, %156, %185 : vector<8x1xi32>
    %c0_78 = arith.constant 0 : index
    %c0_79 = arith.constant 0 : index
    %c0_80 = arith.constant 0 : index
    %c0_81 = arith.constant 0 : index
    %187 = vector.load %arg4[%c0_78, %c0_79, %c0_80, %c0_81] : memref<1x4x8x8xf32, #tpu.memory_space<vmem>>, vector<1x1x8x8xf32>
    %188 = vector.shape_cast %187 : vector<1x1x8x8xf32> to vector<8x8xf32>
    %189 = vector.shape_cast %186 : vector<8x1xi1> to vector<8x1xi1>
    %190 = vector.broadcast %189 : vector<8x1xi1> to vector<8x8xi1>
    %191 = arith.select %190, %188, %184 : vector<8x8xi1>, vector<8x8xf32>
    %c1_i32_82 = arith.constant 1 : i32
    %192 = vector.broadcast %c1_i32_82 : i32 to vector<8x1xi32>
    %193 = arith.cmpi eq, %156, %192 : vector<8x1xi32>
    %c0_83 = arith.constant 0 : index
    %c1_84 = arith.constant 1 : index
    %c0_85 = arith.constant 0 : index
    %c0_86 = arith.constant 0 : index
    %194 = vector.load %arg4[%c0_83, %c1_84, %c0_85, %c0_86] : memref<1x4x8x8xf32, #tpu.memory_space<vmem>>, vector<1x1x8x8xf32>
    %195 = vector.shape_cast %194 : vector<1x1x8x8xf32> to vector<8x8xf32>
    %196 = vector.shape_cast %193 : vector<8x1xi1> to vector<8x1xi1>
    %197 = vector.broadcast %196 : vector<8x1xi1> to vector<8x8xi1>
    %198 = arith.select %197, %195, %191 : vector<8x8xi1>, vector<8x8xf32>
    %c2_i32_87 = arith.constant 2 : i32
    %199 = vector.broadcast %c2_i32_87 : i32 to vector<8x1xi32>
    %200 = arith.cmpi eq, %156, %199 : vector<8x1xi32>
    %c0_88 = arith.constant 0 : index
    %c2_89 = arith.constant 2 : index
    %c0_90 = arith.constant 0 : index
    %c0_91 = arith.constant 0 : index
    %201 = vector.load %arg4[%c0_88, %c2_89, %c0_90, %c0_91] : memref<1x4x8x8xf32, #tpu.memory_space<vmem>>, vector<1x1x8x8xf32>
    %202 = vector.shape_cast %201 : vector<1x1x8x8xf32> to vector<8x8xf32>
    %203 = vector.shape_cast %200 : vector<8x1xi1> to vector<8x1xi1>
    %204 = vector.broadcast %203 : vector<8x1xi1> to vector<8x8xi1>
    %205 = arith.select %204, %202, %198 : vector<8x8xi1>, vector<8x8xf32>
    %c3_i32_92 = arith.constant 3 : i32
    %206 = vector.broadcast %c3_i32_92 : i32 to vector<8x1xi32>
    %207 = arith.cmpi eq, %156, %206 : vector<8x1xi32>
    %c0_93 = arith.constant 0 : index
    %c3_94 = arith.constant 3 : index
    %c0_95 = arith.constant 0 : index
    %c0_96 = arith.constant 0 : index
    %208 = vector.load %arg4[%c0_93, %c3_94, %c0_95, %c0_96] : memref<1x4x8x8xf32, #tpu.memory_space<vmem>>, vector<1x1x8x8xf32>
    %209 = vector.shape_cast %208 : vector<1x1x8x8xf32> to vector<8x8xf32>
    %210 = vector.shape_cast %207 : vector<8x1xi1> to vector<8x1xi1>
    %211 = vector.broadcast %210 : vector<8x1xi1> to vector<8x8xi1>
    %212 = arith.select %211, %209, %205 : vector<8x8xi1>, vector<8x8xf32>
    %cst_97 = arith.constant 0.000000e+00 : f32
    %213 = vector.broadcast %cst_97 : f32 to vector<8x8xf32>
    %214 = arith.select %183, %212, %213 : vector<8x8xi1>, vector<8x8xf32>
    %215 = arith.addf %129, %214 : vector<8x8xf32>
    %216 = vector.broadcast %156 : vector<8x1xi32> to vector<8x8xi32>
    %217 = arith.cmpi eq, %45, %216 : vector<8x8xi32>
    %218 = arith.andi %183, %217 : vector<8x8xi1>
    %cst_98 = arith.constant 1.000000e+00 : f32
    %cst_99 = arith.constant 0.000000e+00 : f32
    %219 = vector.broadcast %cst_98 : f32 to vector<8x8xf32>
    %220 = vector.broadcast %cst_99 : f32 to vector<8x8xf32>
    %221 = arith.select %218, %219, %220 : vector<8x8xi1>, vector<8x8xf32>
    %222 = arith.addf %136, %221 : vector<8x8xf32>
    %cst_100 = arith.constant dense<0x7F800000> : vector<8xf32>
    %223 = vector.multi_reduction <minimumf>, %151, %cst_100 [1] : vector<8x16xf32> to vector<8xf32>
    %224 = vector.shape_cast %223 : vector<8xf32> to vector<8x1xf32>
    %225 = vector.broadcast %224 : vector<8x1xf32> to vector<8x16xf32>
    %226 = arith.cmpf oeq, %151, %225 : vector<8x16xf32>
    %c16_i32_101 = arith.constant 16 : i32
    %227 = vector.broadcast %c16_i32_101 : i32 to vector<8x16xi32>
    %228 = arith.select %226, %0, %227 : vector<8x16xi1>, vector<8x16xi32>
    %cst_102 = arith.constant dense<2147483647> : vector<8xi32>
    %229 = vector.multi_reduction <minsi>, %228, %cst_102 [1] : vector<8x16xi32> to vector<8xi32>
    %230 = vector.shape_cast %229 : vector<8xi32> to vector<8x1xi32>
    %231 = vector.broadcast %230 : vector<8x1xi32> to vector<8x16xi32>
    %232 = arith.cmpi eq, %0, %231 : vector<8x16xi32>
    %233 = arith.extui %232 : vector<8x16xi1> to vector<8x16xi32>
    %234 = arith.sitofp %233 : vector<8x16xi32> to vector<8x16xf32>
    %cst_103 = arith.constant dense<0.000000e+00> : vector<8x4xf32>
    %235 = tpu.matmul %234, %5, %cst_103 {dimension_numbers = #tpu.dot_dimension_numbers<[1], [1], [0], [0], [0, 0, 1, 0], [], []>} : vector<8x16xf32>, vector<4x16xf32>, vector<8x4xf32> -> vector<8x4xf32>
    %cst_104 = arith.constant 0x7F800000 : f32
    %236 = vector.broadcast %cst_104 : f32 to vector<8x16xf32>
    %237 = arith.select %232, %236, %151 : vector<8x16xi1>, vector<8x16xf32>
    %238 = vector.extract_strided_slice %235 {offsets = [0, 0], sizes = [8, 1], strides = [1, 1]} : vector<8x4xf32> to vector<8x1xf32>
    %239 = vector.extract_strided_slice %235 {offsets = [0, 1], sizes = [8, 1], strides = [1, 1]} : vector<8x4xf32> to vector<8x1xf32>
    %240 = vector.extract_strided_slice %235 {offsets = [0, 2], sizes = [8, 1], strides = [1, 1]} : vector<8x4xf32> to vector<8x1xf32>
    %241 = vector.extract_strided_slice %235 {offsets = [0, 3], sizes = [8, 1], strides = [1, 1]} : vector<8x4xf32> to vector<8x1xf32>
    %242 = arith.fptosi %241 : vector<8x1xf32> to vector<8x1xi32>
    %243 = vector.broadcast %238 : vector<8x1xf32> to vector<8x8xf32>
    %244 = arith.subf %7, %243 : vector<8x8xf32>
    %245 = vector.broadcast %239 : vector<8x1xf32> to vector<8x8xf32>
    %246 = arith.subf %9, %245 : vector<8x8xf32>
    %247 = vector.broadcast %240 : vector<8x1xf32> to vector<8x8xf32>
    %248 = arith.subf %11, %247 : vector<8x8xf32>
    %249 = arith.mulf %244, %244 : vector<8x8xf32>
    %250 = arith.mulf %246, %246 : vector<8x8xf32>
    %251 = arith.addf %249, %250 : vector<8x8xf32>
    %252 = arith.mulf %248, %248 : vector<8x8xf32>
    %253 = arith.addf %251, %252 : vector<8x8xf32>
    %254 = arith.cmpf olt, %253, %172 : vector<8x8xf32>
    %255 = vector.shape_cast %241 : vector<8x1xf32> to vector<8x1xf32>
    %256 = vector.broadcast %255 : vector<8x1xf32> to vector<8x8xf32>
    %257 = arith.select %254, %256, %171 : vector<8x8xi1>, vector<8x8xf32>
    %258 = arith.select %254, %253, %172 : vector<8x8xi1>, vector<8x8xf32>
    %cst_105 = arith.constant dense<0x7F800000> : vector<8xf32>
    %259 = vector.multi_reduction <minimumf>, %253, %cst_105 [1] : vector<8x8xf32> to vector<8xf32>
    %260 = vector.shape_cast %259 : vector<8xf32> to vector<8x1xf32>
    %261 = arith.addf %175, %260 : vector<8x1xf32>
    %262 = vector.broadcast %260 : vector<8x1xf32> to vector<8x8xf32>
    %263 = arith.cmpf oeq, %253, %262 : vector<8x8xf32>
    %c8_i32_106 = arith.constant 8 : i32
    %264 = vector.broadcast %c8_i32_106 : i32 to vector<8x8xi32>
    %265 = arith.select %263, %1, %264 : vector<8x8xi1>, vector<8x8xi32>
    %cst_107 = arith.constant dense<2147483647> : vector<8xi32>
    %266 = vector.multi_reduction <minsi>, %265, %cst_107 [1] : vector<8x8xi32> to vector<8xi32>
    %267 = vector.shape_cast %266 : vector<8xi32> to vector<8x1xi32>
    %268 = vector.broadcast %267 : vector<8x1xi32> to vector<8x8xi32>
    %269 = arith.cmpi eq, %1, %268 : vector<8x8xi32>
    %cst_108 = arith.constant 0.000000e+00 : f32
    %270 = vector.broadcast %cst_108 : f32 to vector<8x8xf32>
    %c0_i32_109 = arith.constant 0 : i32
    %271 = vector.broadcast %c0_i32_109 : i32 to vector<8x1xi32>
    %272 = arith.cmpi eq, %242, %271 : vector<8x1xi32>
    %c0_110 = arith.constant 0 : index
    %c0_111 = arith.constant 0 : index
    %c0_112 = arith.constant 0 : index
    %c0_113 = arith.constant 0 : index
    %273 = vector.load %arg4[%c0_110, %c0_111, %c0_112, %c0_113] : memref<1x4x8x8xf32, #tpu.memory_space<vmem>>, vector<1x1x8x8xf32>
    %274 = vector.shape_cast %273 : vector<1x1x8x8xf32> to vector<8x8xf32>
    %275 = vector.shape_cast %272 : vector<8x1xi1> to vector<8x1xi1>
    %276 = vector.broadcast %275 : vector<8x1xi1> to vector<8x8xi1>
    %277 = arith.select %276, %274, %270 : vector<8x8xi1>, vector<8x8xf32>
    %c1_i32_114 = arith.constant 1 : i32
    %278 = vector.broadcast %c1_i32_114 : i32 to vector<8x1xi32>
    %279 = arith.cmpi eq, %242, %278 : vector<8x1xi32>
    %c0_115 = arith.constant 0 : index
    %c1_116 = arith.constant 1 : index
    %c0_117 = arith.constant 0 : index
    %c0_118 = arith.constant 0 : index
    %280 = vector.load %arg4[%c0_115, %c1_116, %c0_117, %c0_118] : memref<1x4x8x8xf32, #tpu.memory_space<vmem>>, vector<1x1x8x8xf32>
    %281 = vector.shape_cast %280 : vector<1x1x8x8xf32> to vector<8x8xf32>
    %282 = vector.shape_cast %279 : vector<8x1xi1> to vector<8x1xi1>
    %283 = vector.broadcast %282 : vector<8x1xi1> to vector<8x8xi1>
    %284 = arith.select %283, %281, %277 : vector<8x8xi1>, vector<8x8xf32>
    %c2_i32_119 = arith.constant 2 : i32
    %285 = vector.broadcast %c2_i32_119 : i32 to vector<8x1xi32>
    %286 = arith.cmpi eq, %242, %285 : vector<8x1xi32>
    %c0_120 = arith.constant 0 : index
    %c2_121 = arith.constant 2 : index
    %c0_122 = arith.constant 0 : index
    %c0_123 = arith.constant 0 : index
    %287 = vector.load %arg4[%c0_120, %c2_121, %c0_122, %c0_123] : memref<1x4x8x8xf32, #tpu.memory_space<vmem>>, vector<1x1x8x8xf32>
    %288 = vector.shape_cast %287 : vector<1x1x8x8xf32> to vector<8x8xf32>
    %289 = vector.shape_cast %286 : vector<8x1xi1> to vector<8x1xi1>
    %290 = vector.broadcast %289 : vector<8x1xi1> to vector<8x8xi1>
    %291 = arith.select %290, %288, %284 : vector<8x8xi1>, vector<8x8xf32>
    %c3_i32_124 = arith.constant 3 : i32
    %292 = vector.broadcast %c3_i32_124 : i32 to vector<8x1xi32>
    %293 = arith.cmpi eq, %242, %292 : vector<8x1xi32>
    %c0_125 = arith.constant 0 : index
    %c3_126 = arith.constant 3 : index
    %c0_127 = arith.constant 0 : index
    %c0_128 = arith.constant 0 : index
    %294 = vector.load %arg4[%c0_125, %c3_126, %c0_127, %c0_128] : memref<1x4x8x8xf32, #tpu.memory_space<vmem>>, vector<1x1x8x8xf32>
    %295 = vector.shape_cast %294 : vector<1x1x8x8xf32> to vector<8x8xf32>
    %296 = vector.shape_cast %293 : vector<8x1xi1> to vector<8x1xi1>
    %297 = vector.broadcast %296 : vector<8x1xi1> to vector<8x8xi1>
    %298 = arith.select %297, %295, %291 : vector<8x8xi1>, vector<8x8xf32>
    %cst_129 = arith.constant 0.000000e+00 : f32
    %299 = vector.broadcast %cst_129 : f32 to vector<8x8xf32>
    %300 = arith.select %269, %298, %299 : vector<8x8xi1>, vector<8x8xf32>
    %301 = arith.addf %215, %300 : vector<8x8xf32>
    %302 = vector.broadcast %242 : vector<8x1xi32> to vector<8x8xi32>
    %303 = arith.cmpi eq, %45, %302 : vector<8x8xi32>
    %304 = arith.andi %269, %303 : vector<8x8xi1>
    %cst_130 = arith.constant 1.000000e+00 : f32
    %cst_131 = arith.constant 0.000000e+00 : f32
    %305 = vector.broadcast %cst_130 : f32 to vector<8x8xf32>
    %306 = vector.broadcast %cst_131 : f32 to vector<8x8xf32>
    %307 = arith.select %304, %305, %306 : vector<8x8xi1>, vector<8x8xf32>
    %308 = arith.addf %222, %307 : vector<8x8xf32>
    %cst_132 = arith.constant dense<0x7F800000> : vector<8xf32>
    %309 = vector.multi_reduction <minimumf>, %237, %cst_132 [1] : vector<8x16xf32> to vector<8xf32>
    %310 = vector.shape_cast %309 : vector<8xf32> to vector<8x1xf32>
    %311 = vector.broadcast %310 : vector<8x1xf32> to vector<8x16xf32>
    %312 = arith.cmpf oeq, %237, %311 : vector<8x16xf32>
    %c16_i32_133 = arith.constant 16 : i32
    %313 = vector.broadcast %c16_i32_133 : i32 to vector<8x16xi32>
    %314 = arith.select %312, %0, %313 : vector<8x16xi1>, vector<8x16xi32>
    %cst_134 = arith.constant dense<2147483647> : vector<8xi32>
    %315 = vector.multi_reduction <minsi>, %314, %cst_134 [1] : vector<8x16xi32> to vector<8xi32>
    %316 = vector.shape_cast %315 : vector<8xi32> to vector<8x1xi32>
    %317 = vector.broadcast %316 : vector<8x1xi32> to vector<8x16xi32>
    %318 = arith.cmpi eq, %0, %317 : vector<8x16xi32>
    %319 = arith.extui %318 : vector<8x16xi1> to vector<8x16xi32>
    %320 = arith.sitofp %319 : vector<8x16xi32> to vector<8x16xf32>
    %cst_135 = arith.constant dense<0.000000e+00> : vector<8x4xf32>
    %321 = tpu.matmul %320, %5, %cst_135 {dimension_numbers = #tpu.dot_dimension_numbers<[1], [1], [0], [0], [0, 0, 1, 0], [], []>} : vector<8x16xf32>, vector<4x16xf32>, vector<8x4xf32> -> vector<8x4xf32>
    %322 = vector.extract_strided_slice %321 {offsets = [0, 0], sizes = [8, 1], strides = [1, 1]} : vector<8x4xf32> to vector<8x1xf32>
    %323 = vector.extract_strided_slice %321 {offsets = [0, 1], sizes = [8, 1], strides = [1, 1]} : vector<8x4xf32> to vector<8x1xf32>
    %324 = vector.extract_strided_slice %321 {offsets = [0, 2], sizes = [8, 1], strides = [1, 1]} : vector<8x4xf32> to vector<8x1xf32>
    %325 = vector.extract_strided_slice %321 {offsets = [0, 3], sizes = [8, 1], strides = [1, 1]} : vector<8x4xf32> to vector<8x1xf32>
    %326 = arith.fptosi %325 : vector<8x1xf32> to vector<8x1xi32>
    %327 = vector.broadcast %322 : vector<8x1xf32> to vector<8x8xf32>
    %328 = arith.subf %7, %327 : vector<8x8xf32>
    %329 = vector.broadcast %323 : vector<8x1xf32> to vector<8x8xf32>
    %330 = arith.subf %9, %329 : vector<8x8xf32>
    %331 = vector.broadcast %324 : vector<8x1xf32> to vector<8x8xf32>
    %332 = arith.subf %11, %331 : vector<8x8xf32>
    %333 = arith.mulf %328, %328 : vector<8x8xf32>
    %334 = arith.mulf %330, %330 : vector<8x8xf32>
    %335 = arith.addf %333, %334 : vector<8x8xf32>
    %336 = arith.mulf %332, %332 : vector<8x8xf32>
    %337 = arith.addf %335, %336 : vector<8x8xf32>
    %338 = arith.cmpf olt, %337, %258 : vector<8x8xf32>
    %339 = vector.shape_cast %325 : vector<8x1xf32> to vector<8x1xf32>
    %340 = vector.broadcast %339 : vector<8x1xf32> to vector<8x8xf32>
    %341 = arith.select %338, %340, %257 : vector<8x8xi1>, vector<8x8xf32>
    %342 = arith.select %338, %337, %258 : vector<8x8xi1>, vector<8x8xf32>
    %cst_136 = arith.constant dense<0x7F800000> : vector<8xf32>
    %343 = vector.multi_reduction <minimumf>, %337, %cst_136 [1] : vector<8x8xf32> to vector<8xf32>
    %344 = vector.shape_cast %343 : vector<8xf32> to vector<8x1xf32>
    %345 = arith.addf %261, %344 : vector<8x1xf32>
    %346 = vector.broadcast %344 : vector<8x1xf32> to vector<8x8xf32>
    %347 = arith.cmpf oeq, %337, %346 : vector<8x8xf32>
    %c8_i32_137 = arith.constant 8 : i32
    %348 = vector.broadcast %c8_i32_137 : i32 to vector<8x8xi32>
    %349 = arith.select %347, %1, %348 : vector<8x8xi1>, vector<8x8xi32>
    %cst_138 = arith.constant dense<2147483647> : vector<8xi32>
    %350 = vector.multi_reduction <minsi>, %349, %cst_138 [1] : vector<8x8xi32> to vector<8xi32>
    %351 = vector.shape_cast %350 : vector<8xi32> to vector<8x1xi32>
    %352 = vector.broadcast %351 : vector<8x1xi32> to vector<8x8xi32>
    %353 = arith.cmpi eq, %1, %352 : vector<8x8xi32>
    %cst_139 = arith.constant 0.000000e+00 : f32
    %354 = vector.broadcast %cst_139 : f32 to vector<8x8xf32>
    %c0_i32_140 = arith.constant 0 : i32
    %355 = vector.broadcast %c0_i32_140 : i32 to vector<8x1xi32>
    %356 = arith.cmpi eq, %326, %355 : vector<8x1xi32>
    %c0_141 = arith.constant 0 : index
    %c0_142 = arith.constant 0 : index
    %c0_143 = arith.constant 0 : index
    %c0_144 = arith.constant 0 : index
    %357 = vector.load %arg4[%c0_141, %c0_142, %c0_143, %c0_144] : memref<1x4x8x8xf32, #tpu.memory_space<vmem>>, vector<1x1x8x8xf32>
    %358 = vector.shape_cast %357 : vector<1x1x8x8xf32> to vector<8x8xf32>
    %359 = vector.shape_cast %356 : vector<8x1xi1> to vector<8x1xi1>
    %360 = vector.broadcast %359 : vector<8x1xi1> to vector<8x8xi1>
    %361 = arith.select %360, %358, %354 : vector<8x8xi1>, vector<8x8xf32>
    %c1_i32_145 = arith.constant 1 : i32
    %362 = vector.broadcast %c1_i32_145 : i32 to vector<8x1xi32>
    %363 = arith.cmpi eq, %326, %362 : vector<8x1xi32>
    %c0_146 = arith.constant 0 : index
    %c1_147 = arith.constant 1 : index
    %c0_148 = arith.constant 0 : index
    %c0_149 = arith.constant 0 : index
    %364 = vector.load %arg4[%c0_146, %c1_147, %c0_148, %c0_149] : memref<1x4x8x8xf32, #tpu.memory_space<vmem>>, vector<1x1x8x8xf32>
    %365 = vector.shape_cast %364 : vector<1x1x8x8xf32> to vector<8x8xf32>
    %366 = vector.shape_cast %363 : vector<8x1xi1> to vector<8x1xi1>
    %367 = vector.broadcast %366 : vector<8x1xi1> to vector<8x8xi1>
    %368 = arith.select %367, %365, %361 : vector<8x8xi1>, vector<8x8xf32>
    %c2_i32_150 = arith.constant 2 : i32
    %369 = vector.broadcast %c2_i32_150 : i32 to vector<8x1xi32>
    %370 = arith.cmpi eq, %326, %369 : vector<8x1xi32>
    %c0_151 = arith.constant 0 : index
    %c2_152 = arith.constant 2 : index
    %c0_153 = arith.constant 0 : index
    %c0_154 = arith.constant 0 : index
    %371 = vector.load %arg4[%c0_151, %c2_152, %c0_153, %c0_154] : memref<1x4x8x8xf32, #tpu.memory_space<vmem>>, vector<1x1x8x8xf32>
    %372 = vector.shape_cast %371 : vector<1x1x8x8xf32> to vector<8x8xf32>
    %373 = vector.shape_cast %370 : vector<8x1xi1> to vector<8x1xi1>
    %374 = vector.broadcast %373 : vector<8x1xi1> to vector<8x8xi1>
    %375 = arith.select %374, %372, %368 : vector<8x8xi1>, vector<8x8xf32>
    %c3_i32_155 = arith.constant 3 : i32
    %376 = vector.broadcast %c3_i32_155 : i32 to vector<8x1xi32>
    %377 = arith.cmpi eq, %326, %376 : vector<8x1xi32>
    %c0_156 = arith.constant 0 : index
    %c3_157 = arith.constant 3 : index
    %c0_158 = arith.constant 0 : index
    %c0_159 = arith.constant 0 : index
    %378 = vector.load %arg4[%c0_156, %c3_157, %c0_158, %c0_159] : memref<1x4x8x8xf32, #tpu.memory_space<vmem>>, vector<1x1x8x8xf32>
    %379 = vector.shape_cast %378 : vector<1x1x8x8xf32> to vector<8x8xf32>
    %380 = vector.shape_cast %377 : vector<8x1xi1> to vector<8x1xi1>
    %381 = vector.broadcast %380 : vector<8x1xi1> to vector<8x8xi1>
    %382 = arith.select %381, %379, %375 : vector<8x8xi1>, vector<8x8xf32>
    %cst_160 = arith.constant 0.000000e+00 : f32
    %383 = vector.broadcast %cst_160 : f32 to vector<8x8xf32>
    %384 = arith.select %353, %382, %383 : vector<8x8xi1>, vector<8x8xf32>
    %385 = arith.addf %301, %384 : vector<8x8xf32>
    %386 = vector.broadcast %326 : vector<8x1xi32> to vector<8x8xi32>
    %387 = arith.cmpi eq, %45, %386 : vector<8x8xi32>
    %388 = arith.andi %353, %387 : vector<8x8xi1>
    %cst_161 = arith.constant 1.000000e+00 : f32
    %cst_162 = arith.constant 0.000000e+00 : f32
    %389 = vector.broadcast %cst_161 : f32 to vector<8x8xf32>
    %390 = vector.broadcast %cst_162 : f32 to vector<8x8xf32>
    %391 = arith.select %388, %389, %390 : vector<8x8xi1>, vector<8x8xf32>
    %392 = arith.addf %308, %391 : vector<8x8xf32>
    %393 = arith.fptosi %341 : vector<8x8xf32> to vector<8x8xi32>
    %cst_163 = arith.constant 0.000000e+00 : f32
    %394 = vector.broadcast %cst_163 : f32 to vector<8x8xf32>
    %c0_i32_164 = arith.constant 0 : i32
    %395 = vector.broadcast %c0_i32_164 : i32 to vector<8x8xi32>
    %396 = arith.cmpi eq, %393, %395 : vector<8x8xi32>
    %c0_165 = arith.constant 0 : index
    %c0_166 = arith.constant 0 : index
    %c0_167 = arith.constant 0 : index
    %c0_168 = arith.constant 0 : index
    %397 = vector.load %arg4[%c0_165, %c0_166, %c0_167, %c0_168] : memref<1x4x8x8xf32, #tpu.memory_space<vmem>>, vector<1x1x8x8xf32>
    %398 = vector.shape_cast %397 : vector<1x1x8x8xf32> to vector<8x8xf32>
    %399 = arith.select %396, %398, %394 : vector<8x8xi1>, vector<8x8xf32>
    %c1_i32_169 = arith.constant 1 : i32
    %400 = vector.broadcast %c1_i32_169 : i32 to vector<8x8xi32>
    %401 = arith.cmpi eq, %393, %400 : vector<8x8xi32>
    %c0_170 = arith.constant 0 : index
    %c1_171 = arith.constant 1 : index
    %c0_172 = arith.constant 0 : index
    %c0_173 = arith.constant 0 : index
    %402 = vector.load %arg4[%c0_170, %c1_171, %c0_172, %c0_173] : memref<1x4x8x8xf32, #tpu.memory_space<vmem>>, vector<1x1x8x8xf32>
    %403 = vector.shape_cast %402 : vector<1x1x8x8xf32> to vector<8x8xf32>
    %404 = arith.select %401, %403, %399 : vector<8x8xi1>, vector<8x8xf32>
    %c2_i32_174 = arith.constant 2 : i32
    %405 = vector.broadcast %c2_i32_174 : i32 to vector<8x8xi32>
    %406 = arith.cmpi eq, %393, %405 : vector<8x8xi32>
    %c0_175 = arith.constant 0 : index
    %c2_176 = arith.constant 2 : index
    %c0_177 = arith.constant 0 : index
    %c0_178 = arith.constant 0 : index
    %407 = vector.load %arg4[%c0_175, %c2_176, %c0_177, %c0_178] : memref<1x4x8x8xf32, #tpu.memory_space<vmem>>, vector<1x1x8x8xf32>
    %408 = vector.shape_cast %407 : vector<1x1x8x8xf32> to vector<8x8xf32>
    %409 = arith.select %406, %408, %404 : vector<8x8xi1>, vector<8x8xf32>
    %c3_i32_179 = arith.constant 3 : i32
    %410 = vector.broadcast %c3_i32_179 : i32 to vector<8x8xi32>
    %411 = arith.cmpi eq, %393, %410 : vector<8x8xi32>
    %c0_180 = arith.constant 0 : index
    %c3_181 = arith.constant 3 : index
    %c0_182 = arith.constant 0 : index
    %c0_183 = arith.constant 0 : index
    %412 = vector.load %arg4[%c0_180, %c3_181, %c0_182, %c0_183] : memref<1x4x8x8xf32, #tpu.memory_space<vmem>>, vector<1x1x8x8xf32>
    %413 = vector.shape_cast %412 : vector<1x1x8x8xf32> to vector<8x8xf32>
    %414 = arith.select %411, %413, %409 : vector<8x8xi1>, vector<8x8xf32>
    %415 = vector.shape_cast %342 : vector<8x8xf32> to vector<1x8x8xf32>
    %cst_184 = arith.constant dense<0.000000e+00> : vector<1xf32>
    %416 = vector.multi_reduction <add>, %415, %cst_184 [1, 2] : vector<1x8x8xf32> to vector<1xf32>
    %417 = vector.shape_cast %416 : vector<1xf32> to vector<1x1x1xf32>
    %418 = vector.extract %417[0, 0, 0] : f32 from vector<1x1x1xf32>
    %cst_185 = arith.constant 0.000000e+00 : f32
    %419 = arith.addf %cst_185, %418 : f32
    %420 = vector.shape_cast %345 : vector<8x1xf32> to vector<1x8x1xf32>
    %cst_186 = arith.constant dense<0.000000e+00> : vector<1xf32>
    %421 = vector.multi_reduction <add>, %420, %cst_186 [1, 2] : vector<1x8x1xf32> to vector<1xf32>
    %422 = vector.shape_cast %421 : vector<1xf32> to vector<1x1x1xf32>
    %423 = vector.extract %422[0, 0, 0] : f32 from vector<1x1x1xf32>
    %cst_187 = arith.constant 0.000000e+00 : f32
    %424 = arith.addf %cst_187, %423 : f32
    %425 = vector.shape_cast %414 : vector<8x8xf32> to vector<1x8x8xf32>
    %cst_188 = arith.constant dense<0.000000e+00> : vector<1xf32>
    %426 = vector.multi_reduction <add>, %425, %cst_188 [1, 2] : vector<1x8x8xf32> to vector<1xf32>
    %427 = vector.shape_cast %426 : vector<1xf32> to vector<1x1x1xf32>
    %428 = vector.extract %427[0, 0, 0] : f32 from vector<1x1x1xf32>
    %cst_189 = arith.constant 0.000000e+00 : f32
    %429 = arith.subf %cst_189, %428 : f32
    %430 = arith.cmpi eq, %45, %393 : vector<8x8xi32>
    %431 = arith.extui %430 : vector<8x8xi1> to vector<8x8xi32>
    %432 = arith.sitofp %431 : vector<8x8xi32> to vector<8x8xf32>
    %433 = vector.shape_cast %432 : vector<8x8xf32> to vector<1x8x8xf32>
    %cst_190 = arith.constant dense<0.000000e+00> : vector<1xf32>
    %434 = vector.multi_reduction <add>, %433, %cst_190 [1, 2] : vector<1x8x8xf32> to vector<1xf32>
    %435 = vector.shape_cast %434 : vector<1xf32> to vector<1x1x1xf32>
    %436 = vector.extract %435[0, 0, 0] : f32 from vector<1x1x1xf32>
    %cst_191 = arith.constant 0.000000e+00 : f32
    %437 = arith.addf %cst_191, %436 : f32
    %438 = vector.shape_cast %385 : vector<8x8xf32> to vector<1x8x8xf32>
    %cst_192 = arith.constant dense<0.000000e+00> : vector<1xf32>
    %439 = vector.multi_reduction <add>, %438, %cst_192 [1, 2] : vector<1x8x8xf32> to vector<1xf32>
    %440 = vector.shape_cast %439 : vector<1xf32> to vector<1x1x1xf32>
    %441 = vector.extract %440[0, 0, 0] : f32 from vector<1x1x1xf32>
    %cst_193 = arith.constant 0.000000e+00 : f32
    %442 = arith.subf %cst_193, %441 : f32
    %443 = vector.shape_cast %392 : vector<8x8xf32> to vector<1x8x8xf32>
    %cst_194 = arith.constant dense<0.000000e+00> : vector<1xf32>
    %444 = vector.multi_reduction <add>, %443, %cst_194 [1, 2] : vector<1x8x8xf32> to vector<1xf32>
    %445 = vector.shape_cast %444 : vector<1xf32> to vector<1x1x1xf32>
    %446 = vector.extract %445[0, 0, 0] : f32 from vector<1x1x1xf32>
    %cst_195 = arith.constant 0.000000e+00 : f32
    %447 = arith.addf %cst_195, %446 : f32
    %448 = tpu.iota {dimensions = array<i32: 1>} : vector<1x128xi32>
    %cst_196 = arith.constant 0.000000e+00 : f32
    %449 = vector.broadcast %cst_196 : f32 to vector<1x128xf32>
    %c0_i32_197 = arith.constant 0 : i32
    %450 = vector.broadcast %c0_i32_197 : i32 to vector<1x128xi32>
    %451 = arith.cmpi eq, %448, %450 : vector<1x128xi32>
    %452 = vector.broadcast %419 : f32 to vector<1x128xf32>
    %453 = arith.select %451, %452, %449 : vector<1x128xi1>, vector<1x128xf32>
    %c1_i32_198 = arith.constant 1 : i32
    %454 = vector.broadcast %c1_i32_198 : i32 to vector<1x128xi32>
    %455 = arith.cmpi eq, %448, %454 : vector<1x128xi32>
    %456 = vector.broadcast %424 : f32 to vector<1x128xf32>
    %457 = arith.select %455, %456, %453 : vector<1x128xi1>, vector<1x128xf32>
    %c2_i32_199 = arith.constant 2 : i32
    %458 = vector.broadcast %c2_i32_199 : i32 to vector<1x128xi32>
    %459 = arith.cmpi eq, %448, %458 : vector<1x128xi32>
    %460 = vector.broadcast %429 : f32 to vector<1x128xf32>
    %461 = arith.select %459, %460, %457 : vector<1x128xi1>, vector<1x128xf32>
    %c3_i32_200 = arith.constant 3 : i32
    %462 = vector.broadcast %c3_i32_200 : i32 to vector<1x128xi32>
    %463 = arith.cmpi eq, %448, %462 : vector<1x128xi32>
    %464 = vector.broadcast %437 : f32 to vector<1x128xf32>
    %465 = arith.select %463, %464, %461 : vector<1x128xi1>, vector<1x128xf32>
    %c4_i32 = arith.constant 4 : i32
    %466 = vector.broadcast %c4_i32 : i32 to vector<1x128xi32>
    %467 = arith.cmpi eq, %448, %466 : vector<1x128xi32>
    %468 = vector.broadcast %442 : f32 to vector<1x128xf32>
    %469 = arith.select %467, %468, %465 : vector<1x128xi1>, vector<1x128xf32>
    %c5_i32 = arith.constant 5 : i32
    %470 = vector.broadcast %c5_i32 : i32 to vector<1x128xi32>
    %471 = arith.cmpi eq, %448, %470 : vector<1x128xi32>
    %472 = vector.broadcast %447 : f32 to vector<1x128xf32>
    %473 = arith.select %471, %472, %469 : vector<1x128xi1>, vector<1x128xf32>
    %c0_201 = arith.constant 0 : index
    %c0_202 = arith.constant 0 : index
    %c0_203 = arith.constant 0 : index
    %474 = vector.load %arg5[%c0_201, %c0_202, %c0_203] : memref<1x1x128xf32, #tpu.memory_space<vmem>>, vector<1x1x128xf32>
    %475 = vector.shape_cast %474 : vector<1x1x128xf32> to vector<1x128xf32>
    %476 = vector.shape_cast %473 : vector<1x128xf32> to vector<1x1x128xf32>
    tpu.vector_store %arg5[%c0_201, %c0_202, %c0_203], %476 {strides = array<i32>} : memref<1x1x128xf32, #tpu.memory_space<vmem>>, vector<1x1x128xf32>,
    return
  }
  func.func @transform_0(%arg0: i32) -> (i32, i32, i32) {
    %c0_i32 = arith.constant 0 : i32
    %c0_i32_0 = arith.constant 0 : i32
    %c0_i32_1 = arith.constant 0 : i32
    return %arg0, %c0_i32, %c0_i32_0 : i32, i32, i32
  }
  func.func @transform_1(%arg0: i32) -> (i32, i32, i32) {
    %c0_i32 = arith.constant 0 : i32
    %c0_i32_0 = arith.constant 0 : i32
    %c0_i32_1 = arith.constant 0 : i32
    return %arg0, %c0_i32, %c0_i32_0 : i32, i32, i32
  }
  func.func @transform_2(%arg0: i32) -> (i32, i32, i32, i32) {
    %c0_i32 = arith.constant 0 : i32
    %c0_i32_0 = arith.constant 0 : i32
    %c0_i32_1 = arith.constant 0 : i32
    %c0_i32_2 = arith.constant 0 : i32
    return %arg0, %c0_i32, %c0_i32_0, %c0_i32_1 : i32, i32, i32, i32
  }
  func.func @transform_3(%arg0: i32) -> (i32, i32, i32, i32) {
    %c0_i32 = arith.constant 0 : i32
    %c0_i32_0 = arith.constant 0 : i32
    %c0_i32_1 = arith.constant 0 : i32
    %c0_i32_2 = arith.constant 0 : i32
    return %arg0, %c0_i32, %c0_i32_0, %c0_i32_1 : i32, i32, i32, i32
  }
  func.func @transform_4(%arg0: i32) -> (i32, i32, i32) {
    %c0_i32 = arith.constant 0 : i32
    %c0_i32_0 = arith.constant 0 : i32
    %c0_i32_1 = arith.constant 0 : i32
    return %arg0, %c0_i32, %c0_i32_0 : i32, i32, i32
  }
}

</mosaic_0001>

<llo_original>
// kernel: tpu_custom_call.1
$region0: #{tpu_custom_call.1}
  #allocation0 [shape = 'u32[]', space=smem, size = 0x4, offset = 0x4, fixed_abs, tag = 'smem constant byte address 0x4 - core index']
  #allocation1 [shape = 'u32[144,128]{1,0:T(1,128)}', space=vmem, size = 0x12000, scoped, tag = 'internal scratch']
  %s0 = inlined_call_operand.vmem [shape: f32[2,8,3], index: 0, kind: input, shape index: {}]
  %s1 = inlined_call_operand.vmem [shape: f32[2,4,16], index: 1, kind: input, shape index: {}]
  %s2 = inlined_call_operand.hbm [shape: f32[2,3,8,8], index: 2, kind: input, shape index: {}]
  %s3 = inlined_call_operand.hbm [shape: f32[2,4,8,8], index: 3, kind: input, shape index: {}]
  %s4 = inlined_call_operand.hbm [shape: f32[2,1,128], index: 4, kind: output, shape index: {}]
  %s5 = sld [smem:[#allocation0]]
  $region57: #{tpu_custom_call.1} parent=0
    _
  %s7 = ssub.s32 1, %s5
  %s8 = scalar_select 0, %s7, %s5
  $region1: #{tpu_custom_call.1} parent=0
    #allocation2 [shape = 'u8[24576]{0}', space=vmem, size = 0x6000, scoped, tag = 'input window, operand 2']
    #allocation3 [shape = 's32[2]{0}', space=sflag, size = 0x8, scoped, tag = 'scoped memory for tpu_custom_call.1']
    #allocation4 [shape = 's32[2]{0}', space=sflag, size = 0x8, scoped, tag = 'scoped memory for tpu_custom_call.1']
    #allocation5 [shape = 'u8[32768]{0}', space=vmem, size = 0x8000, scoped, tag = 'input window, operand 3']
    #allocation6 [shape = 's32[2]{0}', space=sflag, size = 0x8, scoped, tag = 'scoped memory for tpu_custom_call.1']
    #allocation7 [shape = 'u8[1024]{0}', space=vmem, size = 0x400, scoped, tag = 'output window, operand 0']
    %9 = vsyncpa [#allocation3], 0
    %s10 = scalar_lea.sflag [#allocation3], 1
    %11 = vsyncpa %s10, 0
    %12 = vsyncpa [#allocation6], 0
    %s13 = scalar_lea.sflag [#allocation6], 1
    %14 = vsyncpa %s13, 0
    %15 = vsyncpa [#allocation4], 0
    %s16 = scalar_lea.sflag [#allocation4], 1
    %17 = vsyncpa %s16, 0
    loop: start=0, step=1, limit=4
    $region2: #{tpu_custom_call.1} parent=1 // loop_pre_header
      _
    $region3: #{tpu_custom_call.1} parent=1 // loop_header
      %s19 = sphi 0, %s23
      %p20 = scmp.ge.s32.totalorder %s19, 4
      %s29 = sphi 0, %s31
      %s32 = sphi 0, %s29
      %s33 = sphi 0, %s32
      %s49 = sphi 0, %s33
      %s55 = sphi 0, %s57
      %s58 = sphi 0, %s55
      %s59 = sphi 0, %s58
      %s75 = sphi 0, %s59
      %s81 = sphi 0, %s83
      %s84 = sphi 0, %s81
      %s85 = sphi 0, %s84
      %s101 = sphi 0, %s85
      %s107 = sphi 0, %s109
      %s110 = sphi 0, %s107
      %s111 = sphi 0, %s110
      %s127 = sphi 0, %s111
      %s133 = sphi 0, %s135
      %s136 = sphi 0, %s133
      %s137 = sphi 0, %s136
      %s153 = sphi 0, %s137
    $region4: #{tpu_custom_call.1} parent=1 // loop_header_branch
      %22 = sbr.rel (%p20) target = $region8
    $region5: #{tpu_custom_call.1} parent=1 // loop_body
      %s24 = ssub.s32 %s19, 1
      %s25 = ssub.s32 %s19, 2
      %s26 = sadd.s32 %s19, 1
      %s27 = ssub.s32 %s19, %s26
      %p28 = scmp.eq.s32.totalorder %s27, 0
      %s30 = sadd.s32 %s29, 1
      %s31 = scalar_select %p28, %s29, %s30
      %p34 = pneg %p28
      %p35 = scmp.eq.s32.totalorder %s19, 1
      %p36 = por %p34, %p35
      %p37 = scmp.ne.s32.totalorder %s29, %s32
      %p38 = scmp.eq.s32.totalorder %s19, 0
      %p39 = por %p37, %p38
      %p40 = scmp.ne.s32.totalorder %s29, %s32
      %p41 = scmp.eq.s32.totalorder %s24, 1
      %p42 = por %p40, %p41
      %p43 = scmp.ne.s32.totalorder %s32, %s33
      %p44 = scmp.eq.s32.totalorder %s24, 0
      %p45 = por %p43, %p44
      %p46 = scmp.ne.s32.totalorder %s32, %s33
      %p47 = scmp.eq.s32.totalorder %s25, 1
      %p48 = por %p46, %p47
      %p50 = scmp.ne.s32.totalorder %s33, %s49
      %p51 = scmp.eq.s32.totalorder %s25, 0
      %p52 = por %p50, %p51
      %s53 = ssub.s32 %s19, %s26
      %p54 = scmp.eq.s32.totalorder %s53, 0
      %s56 = sadd.s32 %s55, 1
      %s57 = scalar_select %p54, %s55, %s56
      %p60 = pneg %p54
      %p61 = scmp.eq.s32.totalorder %s19, 1
      %p62 = por %p60, %p61
      %p63 = scmp.ne.s32.totalorder %s55, %s58
      %p64 = scmp.eq.s32.totalorder %s19, 0
      %p65 = por %p63, %p64
      %p66 = scmp.ne.s32.totalorder %s55, %s58
      %p67 = scmp.eq.s32.totalorder %s24, 1
      %p68 = por %p66, %p67
      %p69 = scmp.ne.s32.totalorder %s58, %s59
      %p70 = scmp.eq.s32.totalorder %s24, 0
      %p71 = por %p69, %p70
      %p72 = scmp.ne.s32.totalorder %s58, %s59
      %p73 = scmp.eq.s32.totalorder %s25, 1
      %p74 = por %p72, %p73
      %p76 = scmp.ne.s32.totalorder %s59, %s75
      %p77 = scmp.eq.s32.totalorder %s25, 0
      %p78 = por %p76, %p77
      %s79 = ssub.s32 %s19, %s26
      %p80 = scmp.eq.s32.totalorder %s79, 0
      %s82 = sadd.s32 %s81, 1
      %s83 = scalar_select %p80, %s81, %s82
      %p86 = pneg %p80
      %p87 = scmp.eq.s32.totalorder %s19, 1
      %p88 = por %p86, %p87
      %p89 = scmp.ne.s32.totalorder %s81, %s84
      %p90 = scmp.eq.s32.totalorder %s19, 0
      %p91 = por %p89, %p90
      %p92 = scmp.ne.s32.totalorder %s81, %s84
      %p93 = scmp.eq.s32.totalorder %s24, 1
      %p94 = por %p92, %p93
      %p95 = scmp.ne.s32.totalorder %s84, %s85
      %p96 = scmp.eq.s32.totalorder %s24, 0
      %p97 = por %p95, %p96
      %p98 = scmp.ne.s32.totalorder %s84, %s85
      %p99 = scmp.eq.s32.totalorder %s25, 1
      %p100 = por %p98, %p99
      %p102 = scmp.ne.s32.totalorder %s85, %s101
      %p103 = scmp.eq.s32.totalorder %s25, 0
      %p104 = por %p102, %p103
      %s105 = ssub.s32 %s19, %s26
      %p106 = scmp.eq.s32.totalorder %s105, 0
      %s108 = sadd.s32 %s107, 1
      %s109 = scalar_select %p106, %s107, %s108
      %p112 = pneg %p106
      %p113 = scmp.eq.s32.totalorder %s19, 1
      %p114 = por %p112, %p113
      %p115 = scmp.ne.s32.totalorder %s107, %s110
      %p116 = scmp.eq.s32.totalorder %s19, 0
      %p117 = por %p115, %p116
      %p118 = scmp.ne.s32.totalorder %s107, %s110
      %p119 = scmp.eq.s32.totalorder %s24, 1
      %p120 = por %p118, %p119
      %p121 = scmp.ne.s32.totalorder %s110, %s111
      %p122 = scmp.eq.s32.totalorder %s24, 0
      %p123 = por %p121, %p122
      %p124 = scmp.ne.s32.totalorder %s110, %s111
      %p125 = scmp.eq.s32.totalorder %s25, 1
      %p126 = por %p124, %p125
      %p128 = scmp.ne.s32.totalorder %s111, %s127
      %p129 = scmp.eq.s32.totalorder %s25, 0
      %p130 = por %p128, %p129
      %s131 = ssub.s32 %s19, %s26
      %p132 = scmp.eq.s32.totalorder %s131, 0
      %s134 = sadd.s32 %s133, 1
      %s135 = scalar_select %p132, %s133, %s134
      %p138 = pneg %p132
      %p139 = scmp.eq.s32.totalorder %s19, 1
      %p140 = por %p138, %p139
      %p141 = scmp.ne.s32.totalorder %s133, %s136
      %p142 = scmp.eq.s32.totalorder %s19, 0
      %p143 = por %p141, %p142
      %p144 = scmp.ne.s32.totalorder %s133, %s136
      %p145 = scmp.eq.s32.totalorder %s24, 1
      %p146 = por %p144, %p145
      %p147 = scmp.ne.s32.totalorder %s136, %s137
      %p148 = scmp.eq.s32.totalorder %s24, 0
      %p149 = por %p147, %p148
      %p150 = scmp.ne.s32.totalorder %s136, %s137
      %p151 = scmp.eq.s32.totalorder %s25, 1
      %p152 = por %p150, %p151
      %p154 = scmp.ne.s32.totalorder %s137, %s153
      %p155 = scmp.eq.s32.totalorder %s25, 0
      %p156 = por %p154, %p155
      %p157 = scmp.le.s32.totalorder 1, %s19
      %p158 = scmp.lt.s32.totalorder %s19, 3
      %p159 = pnand %p157, %p158
      %p160 = pneg %p159
      // Predicated region
      $region9: #{tpu_custom_call.1} parent=5 // pred_check
        _
      $region10: #{tpu_custom_call.1} parent=5 // pred_check_branch
        %162 = sbr.rel (%p159) target = $region12
      $region11: #{tpu_custom_call.1} parent=5 // pred_region
        %s163 = ssub.s32 %s19, 1
      $region12: #{tpu_custom_call.1} parent=5 // pred_fallthru
        _
      %p164 = scmp.lt.s32.totalorder %s19, 2
      // Predicated region
      $region13: #{tpu_custom_call.1} parent=5 // pred_check
        %p165 = pneg %p164
      $region14: #{tpu_custom_call.1} parent=5 // pred_check_branch
        %167 = sbr.rel (%p165) target = $region16
      $region15: #{tpu_custom_call.1} parent=5 // pred_region
        // Predicated region
        $region17: #{tpu_custom_call.1} parent=15 // pred_check
          %p168 = pneg %p39
        $region18: #{tpu_custom_call.1} parent=15 // pred_check_branch
          %170 = sbr.rel (%p168) target = $region20
        $region19: #{tpu_custom_call.1} parent=15 // pred_region
          %p171 = scmp.lt.s32.totalorder %s19, 1
          %s172 = scalar_select %p171, %s19, 1
          %s173 = smul.addr %s172, 8
          %s174 = scalar_lea.vmem %s0, %s173
        $region20: #{tpu_custom_call.1} parent=15 // pred_fallthru
          _
        // Predicated region
        $region21: #{tpu_custom_call.1} parent=15 // pred_check
          %p175 = pneg %p65
        $region22: #{tpu_custom_call.1} parent=15 // pred_check_branch
          %177 = sbr.rel (%p175) target = $region24
        $region23: #{tpu_custom_call.1} parent=15 // pred_region
          %p178 = scmp.lt.s32.totalorder %s19, 1
          %s179 = scalar_select %p178, %s19, 1
          %s180 = smul.addr %s179, 4
          %s181 = scalar_lea.vmem %s1, %s180
        $region24: #{tpu_custom_call.1} parent=15 // pred_fallthru
          _
        // Predicated region
        $region25: #{tpu_custom_call.1} parent=15 // pred_check
          %p182 = pneg %p91
        $region26: #{tpu_custom_call.1} parent=15 // pred_check_branch
          %184 = sbr.rel (%p182) target = $region28
        $region27: #{tpu_custom_call.1} parent=15 // pred_region
          %s185 = sand.u32 %s81, 1
          %s186 = scalar_lea.sflag [#allocation3], %s185
          %s187 = sand.u32 %s81, 1
          %s188 = smul.addr %s187, 24
          %s189 = scalar_lea.vmem [#allocation2], %s188
          %s191 = ssub.s32 384, 384
          %192 = vsyncadd %s186, %s191
          %s193 = smul.addr %s19, 3
          %s194 = smul.addr %s193, 128
          %s195 = scalar_lea.hbm %s2, %s194
          %s196 = sshll.u32 %s189, 4
          %s197 = int_to_ptr.vmem [resolvable:$true] %s196
          %202 = dma.hbm_to_vmem [thread:$0]  %s195, 384, %s197, %s186, 128, 128, 8
        $region28: #{tpu_custom_call.1} parent=15 // pred_fallthru
          _
        // Predicated region
        $region29: #{tpu_custom_call.1} parent=15 // pred_check
          %p203 = pneg %p117
        $region30: #{tpu_custom_call.1} parent=15 // pred_check_branch
          %205 = sbr.rel (%p203) target = $region32
        $region31: #{tpu_custom_call.1} parent=15 // pred_region
          %s206 = sand.u32 %s107, 1
          %s207 = scalar_lea.sflag [#allocation6], %s206
          %s208 = sand.u32 %s107, 1
          %s209 = smul.addr %s208, 32
          %s210 = scalar_lea.vmem [#allocation5], %s209
          %s212 = ssub.s32 512, 512
          %213 = vsyncadd %s207, %s212
          %s214 = smul.addr %s19, 4
          %s215 = smul.addr %s214, 128
          %s216 = scalar_lea.hbm %s3, %s215
          %s217 = sshll.u32 %s210, 4
          %s218 = int_to_ptr.vmem [resolvable:$true] %s217
          %223 = dma.hbm_to_vmem [thread:$0]  %s216, 512, %s218, %s207, 128, 128, 8
        $region32: #{tpu_custom_call.1} parent=15 // pred_fallthru
          _
      $region16: #{tpu_custom_call.1} parent=5 // pred_fallthru
        _
      %p224 = scmp.le.s32.totalorder 1, %s19
      %p225 = scmp.lt.s32.totalorder %s19, 3
      %p226 = pnand %p224, %p225
      %p227 = pneg %p226
      // Predicated region
      $region33: #{tpu_custom_call.1} parent=5 // pred_check
        _
      $region34: #{tpu_custom_call.1} parent=5 // pred_check_branch
        %229 = sbr.rel (%p226) target = $region36
      $region35: #{tpu_custom_call.1} parent=5 // pred_region
        %s230 = ssub.s32 %s19, 1
        %s231 = sand.u32 %s84, 1
        %s232 = scalar_lea.sflag [#allocation3], %s231
        %s233 = sand.u32 %s84, 1
        %s234 = smul.addr %s233, 24
        %s235 = scalar_lea.vmem [#allocation2], %s234
        // Predicated region
        $region37: #{tpu_custom_call.1} parent=35 // pred_check
          %p236 = pneg %p97
        $region38: #{tpu_custom_call.1} parent=35 // pred_check_branch
          %238 = sbr.rel (%p236) target = $region40
        $region39: #{tpu_custom_call.1} parent=35 // pred_region
          %239 = dma.done %s232, 384
        $region40: #{tpu_custom_call.1} parent=35 // pred_fallthru
          _
        %s240 = sand.u32 %s110, 1
        %s241 = scalar_lea.sflag [#allocation6], %s240
        %s242 = sand.u32 %s110, 1
        %s243 = smul.addr %s242, 32
        %s244 = scalar_lea.vmem [#allocation5], %s243
        // Predicated region
        $region41: #{tpu_custom_call.1} parent=35 // pred_check
          %p245 = pneg %p123
        $region42: #{tpu_custom_call.1} parent=35 // pred_check_branch
          %247 = sbr.rel (%p245) target = $region44
        $region43: #{tpu_custom_call.1} parent=35 // pred_region
          %248 = dma.done %s241, 512
        $region44: #{tpu_custom_call.1} parent=35 // pred_fallthru
          _
        %p249 = scmp.lt.s32.totalorder %s24, 1
        %s250 = scalar_select %p249, %s24, 1
        %s251 = smul.addr %s250, 8
        %s252 = scalar_lea.vmem %s0, %s251
        %p253 = pneg %p45
        %p254 = pneg %p42
        %p255 = scmp.lt.s32.totalorder %s24, 1
        %s256 = scalar_select %p255, %s24, 1
        %s257 = smul.addr %s256, 4
        %s258 = scalar_lea.vmem %s1, %s257
        %p259 = pneg %p71
        %p260 = pneg %p68
        %s261 = sand.u32 %s84, 1
        %s262 = scalar_lea.sflag [#allocation3], %s261
        %s263 = sand.u32 %s84, 1
        %s264 = smul.addr %s263, 24
        %s265 = scalar_lea.vmem [#allocation2], %s264
        %p266 = pneg %p97
        %p267 = pneg %p94
        %s268 = sand.u32 %s110, 1
        %s269 = scalar_lea.sflag [#allocation6], %s268
        %s270 = sand.u32 %s110, 1
        %s271 = smul.addr %s270, 32
        %s272 = scalar_lea.vmem [#allocation5], %s271
        %p273 = pneg %p123
        %p274 = pneg %p120
        %p275 = pneg %p149
        %p276 = pneg %p146
        %s277 = sand.u32 %s136, 1
        %s278 = scalar_lea.sflag [#allocation4], %s277
        %s279 = sand.u32 %s136, 1
        %s280 = scalar_lea.vmem [#allocation7], %s279
        %p281 = scmp.lt.s32.totalorder %s24, 1
        %s282 = scalar_select %p281, %s24, 1
        %s283 = smul.addr %s282, 8
        %s284 = scalar_lea.vmem %s0, %s283
        %p285 = scmp.lt.s32.totalorder %s24, 1
        %s286 = scalar_select %p285, %s24, 1
        %s287 = smul.addr %s286, 4
        %s288 = scalar_lea.vmem %s1, %s287
        %v289 = vlaneseq
        %v290 = vand.u32 %v289, 127
        %v291 = vld [vmem:[%s284] sm:$0xff]
        %v292 = vld [vmem:[%s288] sm:$0xf]
        %v293 = vld [vmem:[%s235] sm:$0xff]
        %s294 = scalar_lea.vmem %s235, 8 [#allocation2]
        %v295 = vld [vmem:[%s294] sm:$0xff]
        %s296 = scalar_lea.vmem %s235, 16 [#allocation2]
        %v297 = vld [vmem:[%s296] sm:$0xff]
        %v298 = vmul.f32 %v291, %v291
        %vm299 = vcmask 23552
        %v300 = vsel %vm299, %v298, 0.0
        %301 = vadd.xlane.f32.xlu0 %v300
        %v302 = vpop.xlane.xlu0 %301
        %v303 = vmul.f32 %v292, %v292
        %vm304 = vcmask 124928
        %v305 = vsel %vm304, %v303, 0.0
        %v306 = vrot.slane %v305, 4
        %v307 = vadd.f32 %v305, %v306
        %v308 = vrot.slane %v307, 2
        %v309 = vadd.f32 %v307, %v308
        %v310 = vrot.slane %v309, 1
        %v311 = vadd.f32 %v309, %v310
        %v313 = vsel %vm299, %v291, 0
        %vm315 = vcmask 1042432
        %v317 = vsel %vm315, %v292, 0
        %319 = vmatprep.subr.mxu0 0.0
        %320 = vmatpush1.msra.mxu0 0.0
        %321 = vmatprep.subr.mxu0 0.0
        %322 = vmatpush1.msra.mxu0 0.0
        %323 = vmatprep.subr.mxu0 0.0
        %324 = vmatpush1.msra.mxu0 0.0
        %325 = vmatprep.subr.mxu0 0.0
        %326 = vmatpush1.msra.mxu0 0.0
        %327 = vmatprep.subr.mxu0 0.0
        %328 = vmatpush1.msra.mxu0 0.0
        %329 = vmatprep.subr.mxu0 0.0
        %330 = vmatpush1.msra.mxu0 0.0
        %331 = vmatprep.subr.mxu0 0.0
        %332 = vmatpush1.msra.mxu0 0.0
        %333 = vmatprep.subr.mxu0 0.0
        %334 = vmatpush1.msra.mxu0 0.0
        %335 = vmatprep.subr.mxu0 0.0
        %336 = vmatpush1.msra.mxu0 0.0
        %337 = vmatprep.subr.mxu0 0.0
        %338 = vmatpush1.msra.mxu0 0.0
        %339 = vmatprep.subr.mxu0 0.0
        %340 = vmatpush1.msra.mxu0 0.0
        %341 = vmatprep.subr.mxu0 0.0
        %342 = vmatpush1.msra.mxu0 0.0
        %343 = vmatprep.subr.mxu0 0.0
        %344 = vmatpush1.msra.mxu0 0.0
        %345 = vmatprep.subr.mxu0 0.0
        %346 = vmatpush1.msra.mxu0 0.0
        %347 = vmatprep.subr.mxu0 0.0
        %348 = vmatpush1.msra.mxu0 0.0
        %349 = vmatprep.subr.mxu0 0.0
        %350 = vmatpush1.msra.mxu0 %v317
        %351 = vmatprep.subr.mxu0 0.0
        %352 = vmatpush2.msra.mxu0 0.0
        %353 = vmatprep.subr.mxu0 0.0
        %354 = vmatpush2.msra.mxu0 0.0
        %355 = vmatprep.subr.mxu0 0.0
        %356 = vmatpush2.msra.mxu0 0.0
        %357 = vmatprep.subr.mxu0 0.0
        %358 = vmatpush2.msra.mxu0 0.0
        %359 = vmatprep.subr.mxu0 0.0
        %360 = vmatpush2.msra.mxu0 0.0
        %361 = vmatprep.subr.mxu0 0.0
        %362 = vmatpush2.msra.mxu0 0.0
        %363 = vmatprep.subr.mxu0 0.0
        %364 = vmatpush2.msra.mxu0 0.0
        %365 = vmatprep.subr.mxu0 0.0
        %366 = vmatpush2.msra.mxu0 0.0
        %367 = vmatprep.subr.mxu0 0.0
        %368 = vmatpush2.msra.mxu0 0.0
        %369 = vmatprep.subr.mxu0 0.0
        %370 = vmatpush2.msra.mxu0 0.0
        %371 = vmatprep.subr.mxu0 0.0
        %372 = vmatpush2.msra.mxu0 0.0
        %373 = vmatprep.subr.mxu0 0.0
        %374 = vmatpush2.msra.mxu0 0.0
        %375 = vmatprep.subr.mxu0 0.0
        %376 = vmatpush2.msra.mxu0 0.0
        %377 = vmatprep.subr.mxu0 0.0
        %378 = vmatpush2.msra.mxu0 0.0
        %379 = vmatprep.subr.mxu0 0.0
        %380 = vmatpush2.msra.mxu0 0.0
        %381 = vmatprep.subr.mxu0 0.0
        %382 = vmatpush2.msra.mxu0 0.0
        %383 = vmatprep.mubr.f32.mxu0 0.0
        %384 = vmatmul.mubr.f32.gmra.mxu0 %v313
        %v385 = vpop.f32.mrf.mxu0
        %v386 = vadd.f32 0.0, %v385
        %v387 = vpop.f32.mrf.mxu0
        %388 = vdwg.mxu0
        %v389 = vadd.f32 %v302, %v311
        %v390 = vmul.f32 %v386, 2.0
        %v391 = vsub.f32 %v389, %v390
        %v392 = vld [vmem:[%s244] sm:$0xff]
        %s393 = scalar_lea.vmem %s244, 8 [#allocation5]
        %v394 = vld [vmem:[%s393] sm:$0xff]
        %vm395 = vcmp.gt.f32.partialorder %v394, %v392
        %v396 = vsel %vm395, 1, 0
        %v397 = vsel %vm395, %v394, %v392
        %s398 = scalar_lea.vmem %s244, 16 [#allocation5]
        %v399 = vld [vmem:[%s398] sm:$0xff]
        %vm400 = vcmp.gt.f32.partialorder %v399, %v397
        %v401 = vsel %vm400, 2, %v396
        %v402 = vsel %vm400, %v399, %v397
        %s403 = scalar_lea.vmem %s244, 24 [#allocation5]
        %v404 = vld [vmem:[%s403] sm:$0xff]
        %vm405 = vcmp.gt.f32.partialorder %v404, %v402
        %v406 = vsel %vm405, 3, %v401
        %vm407 = vcmask 130048
        %v408 = vsel %vm407, %v391, inf
        %409 = vmin.xlane.f32.xlu0 %v408
        %v410 = vpop.xlane.xlu0 %409
        %vm411 = vcmp.eq.f32.partialorder %v391, %v410
        %v412 = vsel %vm411, %v290, 16
        %v413 = vsel %vm407, %v412, 2147483647
        %v414 = vand.u32 %v413, 65535
        %v415 = vshra.s32 %v413, 16
        %v416 = vcvt.s32.f32 %v414
        %v417 = vcvt.s32.f32 %v415
        %418 = vmin.xlane.f32.xlu0 %v417
        %v419 = vpop.xlane.xlu0 %418
        %vm420 = vcmp.eq.f32.partialorder %v417, %v419
        %v421 = vsel %vm420, %v416, inf
        %422 = vmin.xlane.f32.xlu0 %v421
        %v423 = vpop.xlane.xlu0 %422
        %v424 = vcvt.f32.s32 %v423
        %v425 = vcvt.f32.s32 %v419
        %v426 = vshll.u32 %v425, 16
        %v427 = vadd.s32 %v426, %v424
        %vm428 = vcmp.eq.s32.totalorder %v290, %v427
        %v429 = vsel %vm428, 1, 0
        %v430 = vcvt.s32.f32 %v429
        %v432 = vsel %vm407, %v430, 0
        %v434 = vsel %vm407, %v292, 0
        %436 = vmatprep.subr.mxu0 0.0
        %437 = vmatpush1.xpose.msra.mxu0 0.0
        %438 = vmatprep.subr.mxu0 0.0
        %439 = vmatpush1.xpose.msra.mxu0 0.0
        %440 = vmatprep.subr.mxu0 0.0
        %441 = vmatpush1.xpose.msra.mxu0 0.0
        %442 = vmatprep.subr.mxu0 0.0
        %443 = vmatpush1.xpose.msra.mxu0 0.0
        %444 = vmatprep.subr.mxu0 0.0
        %445 = vmatpush1.xpose.msra.mxu0 0.0
        %446 = vmatprep.subr.mxu0 0.0
        %447 = vmatpush1.xpose.msra.mxu0 0.0
        %448 = vmatprep.subr.mxu0 0.0
        %449 = vmatpush1.xpose.msra.mxu0 0.0
        %450 = vmatprep.subr.mxu0 0.0
        %451 = vmatpush1.xpose.msra.mxu0 0.0
        %452 = vmatprep.subr.mxu0 0.0
        %453 = vmatpush1.xpose.msra.mxu0 0.0
        %454 = vmatprep.subr.mxu0 0.0
        %455 = vmatpush1.xpose.msra.mxu0 0.0
        %456 = vmatprep.subr.mxu0 0.0
        %457 = vmatpush1.xpose.msra.mxu0 0.0
        %458 = vmatprep.subr.mxu0 0.0
        %459 = vmatpush1.xpose.msra.mxu0 0.0
        %460 = vmatprep.subr.mxu0 0.0
        %461 = vmatpush1.xpose.msra.mxu0 0.0
        %462 = vmatprep.subr.mxu0 0.0
        %463 = vmatpush1.xpose.msra.mxu0 0.0
        %464 = vmatprep.subr.mxu0 0.0
        %465 = vmatpush1.xpose.msra.mxu0 0.0
        %466 = vmatprep.subr.mxu0 0.0
        %467 = vmatpush1.xpose.msra.mxu0 %v434
        %468 = vmatprep.subr.mxu0 0.0
        %469 = vmatpush2.xpose.msra.mxu0 0.0
        %470 = vmatprep.subr.mxu0 0.0
        %471 = vmatpush2.xpose.msra.mxu0 0.0
        %472 = vmatprep.subr.mxu0 0.0
        %473 = vmatpush2.xpose.msra.mxu0 0.0
        %474 = vmatprep.subr.mxu0 0.0
        %475 = vmatpush2.xpose.msra.mxu0 0.0
        %476 = vmatprep.subr.mxu0 0.0
        %477 = vmatpush2.xpose.msra.mxu0 0.0
        %478 = vmatprep.subr.mxu0 0.0
        %479 = vmatpush2.xpose.msra.mxu0 0.0
        %480 = vmatprep.subr.mxu0 0.0
        %481 = vmatpush2.xpose.msra.mxu0 0.0
        %482 = vmatprep.subr.mxu0 0.0
        %483 = vmatpush2.xpose.msra.mxu0 0.0
        %484 = vmatprep.subr.mxu0 0.0
        %485 = vmatpush2.xpose.msra.mxu0 0.0
        %486 = vmatprep.subr.mxu0 0.0
        %487 = vmatpush2.xpose.msra.mxu0 0.0
        %488 = vmatprep.subr.mxu0 0.0
        %489 = vmatpush2.xpose.msra.mxu0 0.0
        %490 = vmatprep.subr.mxu0 0.0
        %491 = vmatpush2.xpose.msra.mxu0 0.0
        %492 = vmatprep.subr.mxu0 0.0
        %493 = vmatpush2.xpose.msra.mxu0 0.0
        %494 = vmatprep.subr.mxu0 0.0
        %495 = vmatpush2.xpose.msra.mxu0 0.0
        %496 = vmatprep.subr.mxu0 0.0
        %497 = vmatpush2.xpose.msra.mxu0 0.0
        %498 = vmatprep.subr.mxu0 0.0
        %499 = vmatpush2.xpose.msra.mxu0 0.0
        %500 = vmatprep.mubr.f32.mxu0 0.0
        %501 = vmatmul.mubr.f32.gmra.mxu0 %v432
        %v502 = vpop.f32.mrf.mxu0
        %v503 = vadd.f32 0.0, %v502
        %v504 = vpop.f32.mrf.mxu0
        %505 = vdwg.mxu0
        %v506 = vsel %vm428, inf, %v391
        %v507 = vcvt.f32.s32.to.zero.pseudo %v503
        %509 = vset.pattern.permute.xlu0 0
        %510 = vperm.xlu0 %509, %v503
        %v511 = vpop.permute.xlu0 %510
        %v513 = vsub.f32 %v293, %v511
        %514 = vset.pattern.permute.xlu0 1
        %515 = vperm.xlu0 %514, %v503
        %v516 = vpop.permute.xlu0 %515
        %v518 = vsub.f32 %v295, %v516
        %519 = vset.pattern.permute.xlu0 2
        %520 = vperm.xlu0 %519, %v503
        %v521 = vpop.permute.xlu0 %520
        %v523 = vsub.f32 %v297, %v521
        %v524 = vmul.f32 %v513, %v513
        %v525 = vmul.f32 %v518, %v518
        %v526 = vadd.f32 %v524, %v525
        %v527 = vmul.f32 %v523, %v523
        %v528 = vadd.f32 %v526, %v527
        %vm529 = vcmp.lt.f32.partialorder %v528, inf
        %530 = vset.pattern.permute.xlu0 3
        %531 = vperm.xlu0 %530, %v503
        %v532 = vpop.permute.xlu0 %531
        %v534 = vsel %vm529, %v532, 0.0
        %v535 = vsel %vm529, %v528, inf
        %vm536 = vcmask 64512
        %v537 = vsel %vm536, %v528, inf
        %538 = vmin.xlane.f32.xlu0 %v537
        %v539 = vpop.xlane.xlu0 %538
        %v540 = vadd.f32 %v539, 0.0
        %vm541 = vcmp.eq.f32.partialorder %v528, %v539
        %v542 = vsel %vm541, %v290, 8
        %v543 = vsel %vm536, %v542, 2147483647
        %v544 = vand.u32 %v543, 65535
        %v545 = vshra.s32 %v543, 16
        %v546 = vcvt.s32.f32 %v544
        %v547 = vcvt.s32.f32 %v545
        %548 = vmin.xlane.f32.xlu0 %v547
        %v549 = vpop.xlane.xlu0 %548
        %vm550 = vcmp.eq.f32.partialorder %v547, %v549
        %v551 = vsel %vm550, %v546, inf
        %552 = vmin.xlane.f32.xlu0 %v551
        %v553 = vpop.xlane.xlu0 %552
        %v554 = vcvt.f32.s32 %v553
        %v555 = vcvt.f32.s32 %v549
        %v556 = vshll.u32 %v555, 16
        %v557 = vadd.s32 %v556, %v554
        %vm558 = vcmp.eq.s32.totalorder %v290, %v557
        %vm559 = vcmp.eq.s32.totalorder %v507, 0
        %v560 = vsel %vm559, 1, 0
        %561 = vset.pattern.permute.xlu0 3
        %562 = vperm.xlu0 %561, %v560
        %v563 = vpop.permute.xlu0 %562
        %vm564 = vcmp.eq.s32.totalorder %v563, 1
        %v565 = vsel %vm564, %v392, 0.0
        %vm566 = vcmp.eq.s32.totalorder %v507, 1
        %v567 = vsel %vm566, 1, 0
        %568 = vset.pattern.permute.xlu0 3
        %569 = vperm.xlu0 %568, %v567
        %v570 = vpop.permute.xlu0 %569
        %vm571 = vcmp.eq.s32.totalorder %v570, 1
        %v572 = vsel %vm571, %v394, %v565
        %vm573 = vcmp.eq.s32.totalorder %v507, 2
        %v574 = vsel %vm573, 1, 0
        %575 = vset.pattern.permute.xlu0 3
        %576 = vperm.xlu0 %575, %v574
        %v577 = vpop.permute.xlu0 %576
        %vm578 = vcmp.eq.s32.totalorder %v577, 1
        %v579 = vsel %vm578, %v399, %v572
        %vm580 = vcmp.eq.s32.totalorder %v507, 3
        %v581 = vsel %vm580, 1, 0
        %582 = vset.pattern.permute.xlu0 3
        %583 = vperm.xlu0 %582, %v581
        %v584 = vpop.permute.xlu0 %583
        %vm585 = vcmp.eq.s32.totalorder %v584, 1
        %v586 = vsel %vm585, %v404, %v579
        %v587 = vsel %vm558, %v586, 0.0
        %v588 = vadd.f32 %v587, 0.0
        %589 = vset.pattern.permute.xlu0 3
        %590 = vperm.xlu0 %589, %v507
        %v591 = vpop.permute.xlu0 %590
        %vm592 = vcmp.eq.s32.totalorder %v406, %v591
        %vm593 = vmand %vm558, %vm592
        %v594 = vsel %vm593, 1.0, 0.0
        %v595 = vadd.f32 %v594, 0.0
        %v596 = vsel %vm407, %v506, inf
        %597 = vmin.xlane.f32.xlu0 %v596
        %v598 = vpop.xlane.xlu0 %597
        %vm599 = vcmp.eq.f32.partialorder %v506, %v598
        %v600 = vsel %vm599, %v290, 16
        %v601 = vsel %vm407, %v600, 2147483647
        %v602 = vand.u32 %v601, 65535
        %v603 = vshra.s32 %v601, 16
        %v604 = vcvt.s32.f32 %v602
        %v605 = vcvt.s32.f32 %v603
        %606 = vmin.xlane.f32.xlu0 %v605
        %v607 = vpop.xlane.xlu0 %606
        %vm608 = vcmp.eq.f32.partialorder %v605, %v607
        %v609 = vsel %vm608, %v604, inf
        %610 = vmin.xlane.f32.xlu0 %v609
        %v611 = vpop.xlane.xlu0 %610
        %v612 = vcvt.f32.s32 %v611
        %v613 = vcvt.f32.s32 %v607
        %v614 = vshll.u32 %v613, 16
        %v615 = vadd.s32 %v614, %v612
        %vm616 = vcmp.eq.s32.totalorder %v290, %v615
        %v617 = vsel %vm616, 1, 0
        %v618 = vcvt.s32.f32 %v617
        %v620 = vsel %vm407, %v618, 0
        %622 = vmatprep.subr.mxu0 0.0
        %623 = vmatpush1.xpose.msra.mxu0 0.0
        %624 = vmatprep.subr.mxu0 0.0
        %625 = vmatpush1.xpose.msra.mxu0 0.0
        %626 = vmatprep.subr.mxu0 0.0
        %627 = vmatpush1.xpose.msra.mxu0 0.0
        %628 = vmatprep.subr.mxu0 0.0
        %629 = vmatpush1.xpose.msra.mxu0 0.0
        %630 = vmatprep.subr.mxu0 0.0
        %631 = vmatpush1.xpose.msra.mxu0 0.0
        %632 = vmatprep.subr.mxu0 0.0
        %633 = vmatpush1.xpose.msra.mxu0 0.0
        %634 = vmatprep.subr.mxu0 0.0
        %635 = vmatpush1.xpose.msra.mxu0 0.0
        %636 = vmatprep.subr.mxu0 0.0
        %637 = vmatpush1.xpose.msra.mxu0 0.0
        %638 = vmatprep.subr.mxu0 0.0
        %639 = vmatpush1.xpose.msra.mxu0 0.0
        %640 = vmatprep.subr.mxu0 0.0
        %641 = vmatpush1.xpose.msra.mxu0 0.0
        %642 = vmatprep.subr.mxu0 0.0
        %643 = vmatpush1.xpose.msra.mxu0 0.0
        %644 = vmatprep.subr.mxu0 0.0
        %645 = vmatpush1.xpose.msra.mxu0 0.0
        %646 = vmatprep.subr.mxu0 0.0
        %647 = vmatpush1.xpose.msra.mxu0 0.0
        %648 = vmatprep.subr.mxu0 0.0
        %649 = vmatpush1.xpose.msra.mxu0 0.0
        %650 = vmatprep.subr.mxu0 0.0
        %651 = vmatpush1.xpose.msra.mxu0 0.0
        %652 = vmatprep.subr.mxu0 0.0
        %653 = vmatpush1.xpose.msra.mxu0 %v434
        %654 = vmatprep.subr.mxu0 0.0
        %655 = vmatpush2.xpose.msra.mxu0 0.0
        %656 = vmatprep.subr.mxu0 0.0
        %657 = vmatpush2.xpose.msra.mxu0 0.0
        %658 = vmatprep.subr.mxu0 0.0
        %659 = vmatpush2.xpose.msra.mxu0 0.0
        %660 = vmatprep.subr.mxu0 0.0
        %661 = vmatpush2.xpose.msra.mxu0 0.0
        %662 = vmatprep.subr.mxu0 0.0
        %663 = vmatpush2.xpose.msra.mxu0 0.0
        %664 = vmatprep.subr.mxu0 0.0
        %665 = vmatpush2.xpose.msra.mxu0 0.0
        %666 = vmatprep.subr.mxu0 0.0
        %667 = vmatpush2.xpose.msra.mxu0 0.0
        %668 = vmatprep.subr.mxu0 0.0
        %669 = vmatpush2.xpose.msra.mxu0 0.0
        %670 = vmatprep.subr.mxu0 0.0
        %671 = vmatpush2.xpose.msra.mxu0 0.0
        %672 = vmatprep.subr.mxu0 0.0
        %673 = vmatpush2.xpose.msra.mxu0 0.0
        %674 = vmatprep.subr.mxu0 0.0
        %675 = vmatpush2.xpose.msra.mxu0 0.0
        %676 = vmatprep.subr.mxu0 0.0
        %677 = vmatpush2.xpose.msra.mxu0 0.0
        %678 = vmatprep.subr.mxu0 0.0
        %679 = vmatpush2.xpose.msra.mxu0 0.0
        %680 = vmatprep.subr.mxu0 0.0
        %681 = vmatpush2.xpose.msra.mxu0 0.0
        %682 = vmatprep.subr.mxu0 0.0
        %683 = vmatpush2.xpose.msra.mxu0 0.0
        %684 = vmatprep.subr.mxu0 0.0
        %685 = vmatpush2.xpose.msra.mxu0 0.0
        %686 = vmatprep.mubr.f32.mxu0 0.0
        %687 = vmatmul.mubr.f32.gmra.mxu0 %v620
        %v688 = vpop.f32.mrf.mxu0
        %v689 = vadd.f32 0.0, %v688
        %v690 = vpop.f32.mrf.mxu0
        %691 = vdwg.mxu0
        %v692 = vsel %vm616, inf, %v506
        %v693 = vcvt.f32.s32.to.zero.pseudo %v689
        %695 = vset.pattern.permute.xlu0 0
        %696 = vperm.xlu0 %695, %v689
        %v697 = vpop.permute.xlu0 %696
        %v699 = vsub.f32 %v293, %v697
        %700 = vset.pattern.permute.xlu0 1
        %701 = vperm.xlu0 %700, %v689
        %v702 = vpop.permute.xlu0 %701
        %v704 = vsub.f32 %v295, %v702
        %705 = vset.pattern.permute.xlu0 2
        %706 = vperm.xlu0 %705, %v689
        %v707 = vpop.permute.xlu0 %706
        %v709 = vsub.f32 %v297, %v707
        %v710 = vmul.f32 %v699, %v699
        %v711 = vmul.f32 %v704, %v704
        %v712 = vadd.f32 %v710, %v711
        %v713 = vmul.f32 %v709, %v709
        %v714 = vadd.f32 %v712, %v713
        %vm715 = vcmp.lt.f32.partialorder %v714, %v535
        %716 = vset.pattern.permute.xlu0 3
        %717 = vperm.xlu0 %716, %v689
        %v718 = vpop.permute.xlu0 %717
        %v720 = vsel %vm715, %v718, %v534
        %v721 = vsel %vm715, %v714, %v535
        %v722 = vsel %vm536, %v714, inf
        %723 = vmin.xlane.f32.xlu0 %v722
        %v724 = vpop.xlane.xlu0 %723
        %v725 = vadd.f32 %v540, %v724
        %vm726 = vcmp.eq.f32.partialorder %v714, %v724
        %v727 = vsel %vm726, %v290, 8
        %v728 = vsel %vm536, %v727, 2147483647
        %v729 = vand.u32 %v728, 65535
        %v730 = vshra.s32 %v728, 16
        %v731 = vcvt.s32.f32 %v729
        %v732 = vcvt.s32.f32 %v730
        %733 = vmin.xlane.f32.xlu0 %v732
        %v734 = vpop.xlane.xlu0 %733
        %vm735 = vcmp.eq.f32.partialorder %v732, %v734
        %v736 = vsel %vm735, %v731, inf
        %737 = vmin.xlane.f32.xlu0 %v736
        %v738 = vpop.xlane.xlu0 %737
        %v739 = vcvt.f32.s32 %v738
        %v740 = vcvt.f32.s32 %v734
        %v741 = vshll.u32 %v740, 16
        %v742 = vadd.s32 %v741, %v739
        %vm743 = vcmp.eq.s32.totalorder %v290, %v742
        %vm744 = vcmp.eq.s32.totalorder %v693, 0
        %v745 = vsel %vm744, 1, 0
        %746 = vset.pattern.permute.xlu0 3
        %747 = vperm.xlu0 %746, %v745
        %v748 = vpop.permute.xlu0 %747
        %vm749 = vcmp.eq.s32.totalorder %v748, 1
        %v750 = vsel %vm749, %v392, 0.0
        %vm751 = vcmp.eq.s32.totalorder %v693, 1
        %v752 = vsel %vm751, 1, 0
        %753 = vset.pattern.permute.xlu0 3
        %754 = vperm.xlu0 %753, %v752
        %v755 = vpop.permute.xlu0 %754
        %vm756 = vcmp.eq.s32.totalorder %v755, 1
        %v757 = vsel %vm756, %v394, %v750
        %vm758 = vcmp.eq.s32.totalorder %v693, 2
        %v759 = vsel %vm758, 1, 0
        %760 = vset.pattern.permute.xlu0 3
        %761 = vperm.xlu0 %760, %v759
        %v762 = vpop.permute.xlu0 %761
        %vm763 = vcmp.eq.s32.totalorder %v762, 1
        %v764 = vsel %vm763, %v399, %v757
        %vm765 = vcmp.eq.s32.totalorder %v693, 3
        %v766 = vsel %vm765, 1, 0
        %767 = vset.pattern.permute.xlu0 3
        %768 = vperm.xlu0 %767, %v766
        %v769 = vpop.permute.xlu0 %768
        %vm770 = vcmp.eq.s32.totalorder %v769, 1
        %v771 = vsel %vm770, %v404, %v764
        %v772 = vsel %vm743, %v771, 0.0
        %v773 = vadd.f32 %v588, %v772
        %774 = vset.pattern.permute.xlu0 3
        %775 = vperm.xlu0 %774, %v693
        %v776 = vpop.permute.xlu0 %775
        %vm777 = vcmp.eq.s32.totalorder %v406, %v776
        %vm778 = vmand %vm743, %vm777
        %v779 = vsel %vm778, 1.0, 0.0
        %v780 = vadd.f32 %v595, %v779
        %v781 = vsel %vm407, %v692, inf
        %782 = vmin.xlane.f32.xlu0 %v781
        %v783 = vpop.xlane.xlu0 %782
        %vm784 = vcmp.eq.f32.partialorder %v692, %v783
        %v785 = vsel %vm784, %v290, 16
        %v786 = vsel %vm407, %v785, 2147483647
        %v787 = vand.u32 %v786, 65535
        %v788 = vshra.s32 %v786, 16
        %v789 = vcvt.s32.f32 %v787
        %v790 = vcvt.s32.f32 %v788
        %791 = vmin.xlane.f32.xlu0 %v790
        %v792 = vpop.xlane.xlu0 %791
        %vm793 = vcmp.eq.f32.partialorder %v790, %v792
        %v794 = vsel %vm793, %v789, inf
        %795 = vmin.xlane.f32.xlu0 %v794
        %v796 = vpop.xlane.xlu0 %795
        %v797 = vcvt.f32.s32 %v796
        %v798 = vcvt.f32.s32 %v792
        %v799 = vshll.u32 %v798, 16
        %v800 = vadd.s32 %v799, %v797
        %vm801 = vcmp.eq.s32.totalorder %v290, %v800
        %v802 = vsel %vm801, 1, 0
        %v803 = vcvt.s32.f32 %v802
        %v805 = vsel %vm407, %v803, 0
        %807 = vmatprep.subr.mxu0 0.0
        %808 = vmatpush1.xpose.msra.mxu0 0.0
        %809 = vmatprep.subr.mxu0 0.0
        %810 = vmatpush1.xpose.msra.mxu0 0.0
        %811 = vmatprep.subr.mxu0 0.0
        %812 = vmatpush1.xpose.msra.mxu0 0.0
        %813 = vmatprep.subr.mxu0 0.0
        %814 = vmatpush1.xpose.msra.mxu0 0.0
        %815 = vmatprep.subr.mxu0 0.0
        %816 = vmatpush1.xpose.msra.mxu0 0.0
        %817 = vmatprep.subr.mxu0 0.0
        %818 = vmatpush1.xpose.msra.mxu0 0.0
        %819 = vmatprep.subr.mxu0 0.0
        %820 = vmatpush1.xpose.msra.mxu0 0.0
        %821 = vmatprep.subr.mxu0 0.0
        %822 = vmatpush1.xpose.msra.mxu0 0.0
        %823 = vmatprep.subr.mxu0 0.0
        %824 = vmatpush1.xpose.msra.mxu0 0.0
        %825 = vmatprep.subr.mxu0 0.0
        %826 = vmatpush1.xpose.msra.mxu0 0.0
        %827 = vmatprep.subr.mxu0 0.0
        %828 = vmatpush1.xpose.msra.mxu0 0.0
        %829 = vmatprep.subr.mxu0 0.0
        %830 = vmatpush1.xpose.msra.mxu0 0.0
        %831 = vmatprep.subr.mxu0 0.0
        %832 = vmatpush1.xpose.msra.mxu0 0.0
        %833 = vmatprep.subr.mxu0 0.0
        %834 = vmatpush1.xpose.msra.mxu0 0.0
        %835 = vmatprep.subr.mxu0 0.0
        %836 = vmatpush1.xpose.msra.mxu0 0.0
        %837 = vmatprep.subr.mxu0 0.0
        %838 = vmatpush1.xpose.msra.mxu0 %v434
        %839 = vmatprep.subr.mxu0 0.0
        %840 = vmatpush2.xpose.msra.mxu0 0.0
        %841 = vmatprep.subr.mxu0 0.0
        %842 = vmatpush2.xpose.msra.mxu0 0.0
        %843 = vmatprep.subr.mxu0 0.0
        %844 = vmatpush2.xpose.msra.mxu0 0.0
        %845 = vmatprep.subr.mxu0 0.0
        %846 = vmatpush2.xpose.msra.mxu0 0.0
        %847 = vmatprep.subr.mxu0 0.0
        %848 = vmatpush2.xpose.msra.mxu0 0.0
        %849 = vmatprep.subr.mxu0 0.0
        %850 = vmatpush2.xpose.msra.mxu0 0.0
        %851 = vmatprep.subr.mxu0 0.0
        %852 = vmatpush2.xpose.msra.mxu0 0.0
        %853 = vmatprep.subr.mxu0 0.0
        %854 = vmatpush2.xpose.msra.mxu0 0.0
        %855 = vmatprep.subr.mxu0 0.0
        %856 = vmatpush2.xpose.msra.mxu0 0.0
        %857 = vmatprep.subr.mxu0 0.0
        %858 = vmatpush2.xpose.msra.mxu0 0.0
        %859 = vmatprep.subr.mxu0 0.0
        %860 = vmatpush2.xpose.msra.mxu0 0.0
        %861 = vmatprep.subr.mxu0 0.0
        %862 = vmatpush2.xpose.msra.mxu0 0.0
        %863 = vmatprep.subr.mxu0 0.0
        %864 = vmatpush2.xpose.msra.mxu0 0.0
        %865 = vmatprep.subr.mxu0 0.0
        %866 = vmatpush2.xpose.msra.mxu0 0.0
        %867 = vmatprep.subr.mxu0 0.0
        %868 = vmatpush2.xpose.msra.mxu0 0.0
        %869 = vmatprep.subr.mxu0 0.0
        %870 = vmatpush2.xpose.msra.mxu0 0.0
        %871 = vmatprep.mubr.f32.mxu0 0.0
        %872 = vmatmul.mubr.f32.gmra.mxu0 %v805
        %v873 = vpop.f32.mrf.mxu0
        %v874 = vadd.f32 0.0, %v873
        %v875 = vpop.f32.mrf.mxu0
        %876 = vdwg.mxu0
        %v877 = vsel %vm801, inf, %v692
        %v878 = vcvt.f32.s32.to.zero.pseudo %v874
        %880 = vset.pattern.permute.xlu0 0
        %881 = vperm.xlu0 %880, %v874
        %v882 = vpop.permute.xlu0 %881
        %v884 = vsub.f32 %v293, %v882
        %885 = vset.pattern.permute.xlu0 1
        %886 = vperm.xlu0 %885, %v874
        %v887 = vpop.permute.xlu0 %886
        %v889 = vsub.f32 %v295, %v887
        %890 = vset.pattern.permute.xlu0 2
        %891 = vperm.xlu0 %890, %v874
        %v892 = vpop.permute.xlu0 %891
        %v894 = vsub.f32 %v297, %v892
        %v895 = vmul.f32 %v884, %v884
        %v896 = vmul.f32 %v889, %v889
        %v897 = vadd.f32 %v895, %v896
        %v898 = vmul.f32 %v894, %v894
        %v899 = vadd.f32 %v897, %v898
        %vm900 = vcmp.lt.f32.partialorder %v899, %v721
        %901 = vset.pattern.permute.xlu0 3
        %902 = vperm.xlu0 %901, %v874
        %v903 = vpop.permute.xlu0 %902
        %v905 = vsel %vm900, %v903, %v720
        %v906 = vsel %vm900, %v899, %v721
        %v907 = vsel %vm536, %v899, inf
        %908 = vmin.xlane.f32.xlu0 %v907
        %v909 = vpop.xlane.xlu0 %908
        %v910 = vadd.f32 %v725, %v909
        %vm911 = vcmp.eq.f32.partialorder %v899, %v909
        %v912 = vsel %vm911, %v290, 8
        %v913 = vsel %vm536, %v912, 2147483647
        %v914 = vand.u32 %v913, 65535
        %v915 = vshra.s32 %v913, 16
        %v916 = vcvt.s32.f32 %v914
        %v917 = vcvt.s32.f32 %v915
        %918 = vmin.xlane.f32.xlu0 %v917
        %v919 = vpop.xlane.xlu0 %918
        %vm920 = vcmp.eq.f32.partialorder %v917, %v919
        %v921 = vsel %vm920, %v916, inf
        %922 = vmin.xlane.f32.xlu0 %v921
        %v923 = vpop.xlane.xlu0 %922
        %v924 = vcvt.f32.s32 %v923
        %v925 = vcvt.f32.s32 %v919
        %v926 = vshll.u32 %v925, 16
        %v927 = vadd.s32 %v926, %v924
        %vm928 = vcmp.eq.s32.totalorder %v290, %v927
        %vm929 = vcmp.eq.s32.totalorder %v878, 0
        %v930 = vsel %vm929, 1, 0
        %931 = vset.pattern.permute.xlu0 3
        %932 = vperm.xlu0 %931, %v930
        %v933 = vpop.permute.xlu0 %932
        %vm934 = vcmp.eq.s32.totalorder %v933, 1
        %v935 = vsel %vm934, %v392, 0.0
        %vm936 = vcmp.eq.s32.totalorder %v878, 1
        %v937 = vsel %vm936, 1, 0
        %938 = vset.pattern.permute.xlu0 3
        %939 = vperm.xlu0 %938, %v937
        %v940 = vpop.permute.xlu0 %939
        %vm941 = vcmp.eq.s32.totalorder %v940, 1
        %v942 = vsel %vm941, %v394, %v935
        %vm943 = vcmp.eq.s32.totalorder %v878, 2
        %v944 = vsel %vm943, 1, 0
        %945 = vset.pattern.permute.xlu0 3
        %946 = vperm.xlu0 %945, %v944
        %v947 = vpop.permute.xlu0 %946
        %vm948 = vcmp.eq.s32.totalorder %v947, 1
        %v949 = vsel %vm948, %v399, %v942
        %vm950 = vcmp.eq.s32.totalorder %v878, 3
        %v951 = vsel %vm950, 1, 0
        %952 = vset.pattern.permute.xlu0 3
        %953 = vperm.xlu0 %952, %v951
        %v954 = vpop.permute.xlu0 %953
        %vm955 = vcmp.eq.s32.totalorder %v954, 1
        %v956 = vsel %vm955, %v404, %v949
        %v957 = vsel %vm928, %v956, 0.0
        %v958 = vadd.f32 %v773, %v957
        %959 = vset.pattern.permute.xlu0 3
        %960 = vperm.xlu0 %959, %v878
        %v961 = vpop.permute.xlu0 %960
        %vm962 = vcmp.eq.s32.totalorder %v406, %v961
        %vm963 = vmand %vm928, %vm962
        %v964 = vsel %vm963, 1.0, 0.0
        %v965 = vadd.f32 %v780, %v964
        %v966 = vsel %vm407, %v877, inf
        %967 = vmin.xlane.f32.xlu0 %v966
        %v968 = vpop.xlane.xlu0 %967
        %vm969 = vcmp.eq.f32.partialorder %v877, %v968
        %v970 = vsel %vm969, %v290, 16
        %v971 = vsel %vm407, %v970, 2147483647
        %v972 = vand.u32 %v971, 65535
        %v973 = vshra.s32 %v971, 16
        %v974 = vcvt.s32.f32 %v972
        %v975 = vcvt.s32.f32 %v973
        %976 = vmin.xlane.f32.xlu0 %v975
        %v977 = vpop.xlane.xlu0 %976
        %vm978 = vcmp.eq.f32.partialorder %v975, %v977
        %v979 = vsel %vm978, %v974, inf
        %980 = vmin.xlane.f32.xlu0 %v979
        %v981 = vpop.xlane.xlu0 %980
        %v982 = vcvt.f32.s32 %v981
        %v983 = vcvt.f32.s32 %v977
        %v984 = vshll.u32 %v983, 16
        %v985 = vadd.s32 %v984, %v982
        %vm986 = vcmp.eq.s32.totalorder %v290, %v985
        %v987 = vsel %vm986, 1, 0
        %v988 = vcvt.s32.f32 %v987
        %v990 = vsel %vm407, %v988, 0
        %992 = vmatprep.subr.mxu0 0.0
        %993 = vmatpush1.xpose.msra.mxu0 0.0
        %994 = vmatprep.subr.mxu0 0.0
        %995 = vmatpush1.xpose.msra.mxu0 0.0
        %996 = vmatprep.subr.mxu0 0.0
        %997 = vmatpush1.xpose.msra.mxu0 0.0
        %998 = vmatprep.subr.mxu0 0.0
        %999 = vmatpush1.xpose.msra.mxu0 0.0
        %1000 = vmatprep.subr.mxu0 0.0
        %1001 = vmatpush1.xpose.msra.mxu0 0.0
        %1002 = vmatprep.subr.mxu0 0.0
        %1003 = vmatpush1.xpose.msra.mxu0 0.0
        %1004 = vmatprep.subr.mxu0 0.0
        %1005 = vmatpush1.xpose.msra.mxu0 0.0
        %1006 = vmatprep.subr.mxu0 0.0
        %1007 = vmatpush1.xpose.msra.mxu0 0.0
        %1008 = vmatprep.subr.mxu0 0.0
        %1009 = vmatpush1.xpose.msra.mxu0 0.0
        %1010 = vmatprep.subr.mxu0 0.0
        %1011 = vmatpush1.xpose.msra.mxu0 0.0
        %1012 = vmatprep.subr.mxu0 0.0
        %1013 = vmatpush1.xpose.msra.mxu0 0.0
        %1014 = vmatprep.subr.mxu0 0.0
        %1015 = vmatpush1.xpose.msra.mxu0 0.0
        %1016 = vmatprep.subr.mxu0 0.0
        %1017 = vmatpush1.xpose.msra.mxu0 0.0
        %1018 = vmatprep.subr.mxu0 0.0
        %1019 = vmatpush1.xpose.msra.mxu0 0.0
        %1020 = vmatprep.subr.mxu0 0.0
        %1021 = vmatpush1.xpose.msra.mxu0 0.0
        %1022 = vmatprep.subr.mxu0 0.0
        %1023 = vmatpush1.xpose.msra.mxu0 %v434
        %1024 = vmatprep.subr.mxu0 0.0
        %1025 = vmatpush2.xpose.msra.mxu0 0.0
        %1026 = vmatprep.subr.mxu0 0.0
        %1027 = vmatpush2.xpose.msra.mxu0 0.0
        %1028 = vmatprep.subr.mxu0 0.0
        %1029 = vmatpush2.xpose.msra.mxu0 0.0
        %1030 = vmatprep.subr.mxu0 0.0
        %1031 = vmatpush2.xpose.msra.mxu0 0.0
        %1032 = vmatprep.subr.mxu0 0.0
        %1033 = vmatpush2.xpose.msra.mxu0 0.0
        %1034 = vmatprep.subr.mxu0 0.0
        %1035 = vmatpush2.xpose.msra.mxu0 0.0
        %1036 = vmatprep.subr.mxu0 0.0
        %1037 = vmatpush2.xpose.msra.mxu0 0.0
        %1038 = vmatprep.subr.mxu0 0.0
        %1039 = vmatpush2.xpose.msra.mxu0 0.0
        %1040 = vmatprep.subr.mxu0 0.0
        %1041 = vmatpush2.xpose.msra.mxu0 0.0
        %1042 = vmatprep.subr.mxu0 0.0
        %1043 = vmatpush2.xpose.msra.mxu0 0.0
        %1044 = vmatprep.subr.mxu0 0.0
        %1045 = vmatpush2.xpose.msra.mxu0 0.0
        %1046 = vmatprep.subr.mxu0 0.0
        %1047 = vmatpush2.xpose.msra.mxu0 0.0
        %1048 = vmatprep.subr.mxu0 0.0
        %1049 = vmatpush2.xpose.msra.mxu0 0.0
        %1050 = vmatprep.subr.mxu0 0.0
        %1051 = vmatpush2.xpose.msra.mxu0 0.0
        %1052 = vmatprep.subr.mxu0 0.0
        %1053 = vmatpush2.xpose.msra.mxu0 0.0
        %1054 = vmatprep.subr.mxu0 0.0
        %1055 = vmatpush2.xpose.msra.mxu0 0.0
        %1056 = vmatprep.mubr.f32.mxu0 0.0
        %1057 = vmatmul.mubr.f32.gmra.mxu0 %v990
        %v1058 = vpop.f32.mrf.mxu0
        %v1059 = vadd.f32 0.0, %v1058
        %v1060 = vpop.f32.mrf.mxu0
        %1061 = vdwg.mxu0
        %v1062 = vcvt.f32.s32.to.zero.pseudo %v1059
        %1064 = vset.pattern.permute.xlu0 0
        %1065 = vperm.xlu0 %1064, %v1059
        %v1066 = vpop.permute.xlu0 %1065
        %v1068 = vsub.f32 %v293, %v1066
        %1069 = vset.pattern.permute.xlu0 1
        %1070 = vperm.xlu0 %1069, %v1059
        %v1071 = vpop.permute.xlu0 %1070
        %v1073 = vsub.f32 %v295, %v1071
        %1074 = vset.pattern.permute.xlu0 2
        %1075 = vperm.xlu0 %1074, %v1059
        %v1076 = vpop.permute.xlu0 %1075
        %v1078 = vsub.f32 %v297, %v1076
        %v1079 = vmul.f32 %v1068, %v1068
        %v1080 = vmul.f32 %v1073, %v1073
        %v1081 = vadd.f32 %v1079, %v1080
        %v1082 = vmul.f32 %v1078, %v1078
        %v1083 = vadd.f32 %v1081, %v1082
        %vm1084 = vcmp.lt.f32.partialorder %v1083, %v906
        %1085 = vset.pattern.permute.xlu0 3
        %1086 = vperm.xlu0 %1085, %v1059
        %v1087 = vpop.permute.xlu0 %1086
        %v1089 = vsel %vm1084, %v1087, %v905
        %v1090 = vsel %vm1084, %v1083, %v906
        %v1091 = vsel %vm536, %v1083, inf
        %1092 = vmin.xlane.f32.xlu0 %v1091
        %v1093 = vpop.xlane.xlu0 %1092
        %v1094 = vadd.f32 %v910, %v1093
        %vm1095 = vcmp.eq.f32.partialorder %v1083, %v1093
        %v1096 = vsel %vm1095, %v290, 8
        %v1097 = vsel %vm536, %v1096, 2147483647
        %v1098 = vand.u32 %v1097, 65535
        %v1099 = vshra.s32 %v1097, 16
        %v1100 = vcvt.s32.f32 %v1098
        %v1101 = vcvt.s32.f32 %v1099
        %1102 = vmin.xlane.f32.xlu0 %v1101
        %v1103 = vpop.xlane.xlu0 %1102
        %vm1104 = vcmp.eq.f32.partialorder %v1101, %v1103
        %v1105 = vsel %vm1104, %v1100, inf
        %1106 = vmin.xlane.f32.xlu0 %v1105
        %v1107 = vpop.xlane.xlu0 %1106
        %v1108 = vcvt.f32.s32 %v1107
        %v1109 = vcvt.f32.s32 %v1103
        %v1110 = vshll.u32 %v1109, 16
        %v1111 = vadd.s32 %v1110, %v1108
        %vm1112 = vcmp.eq.s32.totalorder %v290, %v1111
        %vm1113 = vcmp.eq.s32.totalorder %v1062, 0
        %v1114 = vsel %vm1113, 1, 0
        %1115 = vset.pattern.permute.xlu0 3
        %1116 = vperm.xlu0 %1115, %v1114
        %v1117 = vpop.permute.xlu0 %1116
        %vm1118 = vcmp.eq.s32.totalorder %v1117, 1
        %v1119 = vsel %vm1118, %v392, 0.0
        %vm1120 = vcmp.eq.s32.totalorder %v1062, 1
        %v1121 = vsel %vm1120, 1, 0
        %1122 = vset.pattern.permute.xlu0 3
        %1123 = vperm.xlu0 %1122, %v1121
        %v1124 = vpop.permute.xlu0 %1123
        %vm1125 = vcmp.eq.s32.totalorder %v1124, 1
        %v1126 = vsel %vm1125, %v394, %v1119
        %vm1127 = vcmp.eq.s32.totalorder %v1062, 2
        %v1128 = vsel %vm1127, 1, 0
        %1129 = vset.pattern.permute.xlu0 3
        %1130 = vperm.xlu0 %1129, %v1128
        %v1131 = vpop.permute.xlu0 %1130
        %vm1132 = vcmp.eq.s32.totalorder %v1131, 1
        %v1133 = vsel %vm1132, %v399, %v1126
        %vm1134 = vcmp.eq.s32.totalorder %v1062, 3
        %v1135 = vsel %vm1134, 1, 0
        %1136 = vset.pattern.permute.xlu0 3
        %1137 = vperm.xlu0 %1136, %v1135
        %v1138 = vpop.permute.xlu0 %1137
        %vm1139 = vcmp.eq.s32.totalorder %v1138, 1
        %v1140 = vsel %vm1139, %v404, %v1133
        %v1141 = vsel %vm1112, %v1140, 0.0
        %v1142 = vadd.f32 %v958, %v1141
        %1143 = vset.pattern.permute.xlu0 3
        %1144 = vperm.xlu0 %1143, %v1062
        %v1145 = vpop.permute.xlu0 %1144
        %vm1146 = vcmp.eq.s32.totalorder %v406, %v1145
        %vm1147 = vmand %vm1112, %vm1146
        %v1148 = vsel %vm1147, 1.0, 0.0
        %v1149 = vadd.f32 %v965, %v1148
        %v1150 = vcvt.f32.s32.to.zero.pseudo %v1089
        %vm1151 = vcmp.eq.s32.totalorder %v1150, 0
        %v1152 = vsel %vm1151, %v392, 0.0
        %vm1153 = vcmp.eq.s32.totalorder %v1150, 1
        %v1154 = vsel %vm1153, %v394, %v1152
        %vm1155 = vcmp.eq.s32.totalorder %v1150, 2
        %v1156 = vsel %vm1155, %v399, %v1154
        %vm1157 = vcmp.eq.s32.totalorder %v1150, 3
        %v1158 = vsel %vm1157, %v404, %v1156
        %v1159 = vsel %vm536, %v1090, 0.0
        %1160 = vadd.xlane.f32.xlu0 %v1159
        %v1161 = vpop.xlane.xlu0 %1160
        %v1162 = vrot.slane %v1161, 4
        %v1163 = vadd.f32 %v1161, %v1162
        %v1164 = vrot.slane %v1163, 2
        %v1165 = vadd.f32 %v1163, %v1164
        %v1166 = vrot.slane %v1165, 1
        %v1167 = vadd.f32 %v1165, %v1166
        %s1168 = vtos %v1167
        %s1169 = sadd.f32 %s1168, 0.0
        %vm1170 = vcmask 7168
        %v1171 = vsel %vm1170, %v1094, 0.0
        %1172 = vadd.xlane.f32.xlu0 %v1171
        %v1173 = vpop.xlane.xlu0 %1172
        %v1174 = vrot.slane %v1173, 4
        %v1175 = vadd.f32 %v1173, %v1174
        %v1176 = vrot.slane %v1175, 2
        %v1177 = vadd.f32 %v1175, %v1176
        %v1178 = vrot.slane %v1177, 1
        %v1179 = vadd.f32 %v1177, %v1178
        %s1180 = vtos %v1179
        %s1181 = sadd.f32 %s1180, 0.0
        %v1182 = vsel %vm536, %v1158, 0.0
        %1183 = vadd.xlane.f32.xlu0 %v1182
        %v1184 = vpop.xlane.xlu0 %1183
        %v1185 = vrot.slane %v1184, 4
        %v1186 = vadd.f32 %v1184, %v1185
        %v1187 = vrot.slane %v1186, 2
        %v1188 = vadd.f32 %v1186, %v1187
        %v1189 = vrot.slane %v1188, 1
        %v1190 = vadd.f32 %v1188, %v1189
        %s1191 = vtos %v1190
        %s1192 = ssub.f32 0.0, %s1191
        %vm1193 = vcmp.eq.s32.totalorder %v406, %v1150
        %v1194 = vsel %vm1193, 1, 0
        %v1195 = vcvt.s32.f32 %v1194
        %v1196 = vsel %vm536, %v1195, 0.0
        %1197 = vadd.xlane.f32.xlu0 %v1196
        %v1198 = vpop.xlane.xlu0 %1197
        %v1199 = vrot.slane %v1198, 4
        %v1200 = vadd.f32 %v1198, %v1199
        %v1201 = vrot.slane %v1200, 2
        %v1202 = vadd.f32 %v1200, %v1201
        %v1203 = vrot.slane %v1202, 1
        %v1204 = vadd.f32 %v1202, %v1203
        %s1205 = vtos %v1204
        %s1206 = sadd.f32 %s1205, 0.0
        %v1207 = vsel %vm536, %v1142, 0.0
        %1208 = vadd.xlane.f32.xlu0 %v1207
        %v1209 = vpop.xlane.xlu0 %1208
        %v1210 = vrot.slane %v1209, 4
        %v1211 = vadd.f32 %v1209, %v1210
        %v1212 = vrot.slane %v1211, 2
        %v1213 = vadd.f32 %v1211, %v1212
        %v1214 = vrot.slane %v1213, 1
        %v1215 = vadd.f32 %v1213, %v1214
        %s1216 = vtos %v1215
        %s1217 = ssub.f32 0.0, %s1216
        %v1218 = vsel %vm536, %v1149, 0.0
        %1219 = vadd.xlane.f32.xlu0 %v1218
        %v1220 = vpop.xlane.xlu0 %1219
        %v1221 = vrot.slane %v1220, 4
        %v1222 = vadd.f32 %v1220, %v1221
        %v1223 = vrot.slane %v1222, 2
        %v1224 = vadd.f32 %v1222, %v1223
        %v1225 = vrot.slane %v1224, 1
        %v1226 = vadd.f32 %v1224, %v1225
        %s1227 = vtos %v1226
        %s1228 = sadd.f32 %s1227, 0.0
        %vm1229 = vcmp.eq.s32.totalorder %v290, 0
        %v1230 = vstv %s1169
        %v1231 = vsel %vm1229, %v1230, 0.0
        %vm1232 = vcmp.eq.s32.totalorder %v290, 1
        %v1233 = vstv %s1181
        %v1234 = vsel %vm1232, %v1233, %v1231
        %vm1235 = vcmp.eq.s32.totalorder %v290, 2
        %v1236 = vstv %s1192
        %v1237 = vsel %vm1235, %v1236, %v1234
        %vm1238 = vcmp.eq.s32.totalorder %v290, 3
        %v1239 = vstv %s1206
        %v1240 = vsel %vm1238, %v1239, %v1237
        %vm1241 = vcmp.eq.s32.totalorder %v290, 4
        %v1242 = vstv %s1217
        %v1243 = vsel %vm1241, %v1242, %v1240
        %vm1244 = vcmp.eq.s32.totalorder %v290, 5
        %v1245 = vstv %s1228
        %v1246 = vsel %vm1244, %v1245, %v1243
        %1247 = vst [vmem:[%s280] sm:$0x1] %v1246
        %s1248 = sand.u32 %s136, 1
        %s1249 = scalar_lea.sflag [#allocation4], %s1248
        %s1250 = sand.u32 %s136, 1
        %s1251 = scalar_lea.vmem [#allocation7], %s1250
        // Predicated region
        $region45: #{tpu_custom_call.1} parent=35 // pred_check
          %p1252 = pneg %p146
        $region46: #{tpu_custom_call.1} parent=35 // pred_check_branch
          %1254 = sbr.rel (%p1252) target = $region48
        $region47: #{tpu_custom_call.1} parent=35 // pred_region
          %s1256 = ssub.s32 16, 16
          %1257 = vsyncadd %s1249, %s1256
          %s1258 = smul.addr %s24, 16
          %s1259 = scalar_lea.hbm %s4, %s1258
          %s1261 = sshll.u32 %s1251, 4
          %s1262 = int_to_ptr.vmem [resolvable:$true] %s1261
          %1264 = dma.vmem_to_hbm [thread:$0]  %s1262, 16, %s1259, %s1249
        $region48: #{tpu_custom_call.1} parent=35 // pred_fallthru
          _
      $region36: #{tpu_custom_call.1} parent=5 // pred_fallthru
        _
      %p1265 = scmp.le.s32.totalorder 2, %s19
      // Predicated region
      $region49: #{tpu_custom_call.1} parent=5 // pred_check
        %p1266 = pneg %p1265
      $region50: #{tpu_custom_call.1} parent=5 // pred_check_branch
        %1268 = sbr.rel (%p1266) target = $region52
      $region51: #{tpu_custom_call.1} parent=5 // pred_region
        %s1269 = ssub.s32 %s19, 2
        // Predicated region
        $region53: #{tpu_custom_call.1} parent=51 // pred_check
          %p1270 = pneg %p152
        $region54: #{tpu_custom_call.1} parent=51 // pred_check_branch
          %1272 = sbr.rel (%p1270) target = $region56
        $region55: #{tpu_custom_call.1} parent=51 // pred_region
          %s1273 = sand.u32 %s137, 1
          %s1274 = scalar_lea.sflag [#allocation4], %s1273
          %s1275 = sand.u32 %s137, 1
          %s1276 = scalar_lea.vmem [#allocation7], %s1275
          %1277 = dma.done %s1274, 16
        $region56: #{tpu_custom_call.1} parent=51 // pred_fallthru
          _
      $region52: #{tpu_custom_call.1} parent=5 // pred_fallthru
        _
    $region6: #{tpu_custom_call.1} parent=1 // loop_footer
      %s23 = sadd.s32 1, %s19
    $region7: #{tpu_custom_call.1} parent=1 // loop_footer_branch
      %18 = sbr.rel target = $region3
    $region8: #{tpu_custom_call.1} parent=1 // loop_exit
      _
    %1278 = vsyncpa [#allocation3], 1
    %s1279 = scalar_lea.sflag [#allocation3], 1
    %1280 = vsyncpa %s1279, 1
    %1281 = vsyncpa [#allocation6], 1
    %s1282 = scalar_lea.sflag [#allocation6], 1
    %1283 = vsyncpa %s1282, 1
    %1284 = vsyncpa [#allocation4], 1
    %s1285 = scalar_lea.sflag [#allocation4], 1
    %1286 = vsyncpa %s1285, 1

</llo_original>
